<compile_context>
chip_gen: v6e
topology: v6e:2x2x1
jax: 0.10.0
libtpu: 0.0.40
codegen_flags: <defaults>
</compile_context>

<pallas_src>
import math

import jax
import jax.numpy as jnp
from jax import lax
from jax.experimental import pallas as pl
from jax.experimental.pallas import tpu as pltpu


def _structured_attention_kernel(x_ref, w_ref, b_ref, m_ref, ctx_ref, d0_ref):
    """One batch-block per grid step: fused projections -> masked scores ->
    matrix-tree marginals (in-kernel Gauss-Jordan inverse) -> context."""
    BB, S, H = x_ref.shape

    # ---- fused Q | K | root projection: a single MXU matmul over BB*S rows --
    x = x_ref[...]                                          # (BB, S, H) f32
    x2d = x.reshape(BB * S, H).astype(jnp.bfloat16)         # leading-dim collapse
    proj = jnp.dot(x2d, w_ref[...], preferred_element_type=jnp.float32)
    proj = proj + b_ref[...]                                # (BB*S, 2H+1) f32
    # wq was pre-scaled by 1/sqrt(H) in the wrapper.
    q = proj[:, :H].reshape(BB, S, H).astype(jnp.bfloat16)
    k = proj[:, H:2 * H].reshape(BB, S, H).astype(jnp.bfloat16)
    root = proj[:, 2 * H:2 * H + 1].reshape(BB, S, 1)       # (BB, S, 1) f32

    # ---- masked / clamped scores, transposed orientation --------------------
    # scores_t[b, i, j] = scores[b, j, i] = k_i . q_j  (mask term is symmetric)
    scores_t = lax.dot_general(k, q, (((2,), (2,)), ((0,), (0,))),
                               preferred_element_type=jnp.float32)  # (BB,S,S)
    m_row = m_ref[...]                                      # (BB, 1, S): 1.0 at padding
    m_col = jnp.swapaxes(m_row, 1, 2)                       # (BB, S, 1), in-kernel
    root = jnp.maximum(root - m_col * 50.0, -40.0)
    scores_t = jnp.maximum(scores_t - m_col * 50.0 - m_row * 50.0, -40.0)

    a_t = jnp.exp(scores_t)                                 # A^T        (BB,S,S) f32
    r_col = jnp.exp(root)                                   # R          (BB,S,1)
    l_col = jnp.sum(a_t, axis=2, keepdims=True)             # col-sums of A -> (BB,S,1)

    # ---- Laplacian (transposed), built with one select ----------------------
    rows = lax.broadcasted_iota(jnp.int32, (1, S, S), 1)
    cols = lax.broadcasted_iota(jnp.int32, (1, S, S), 2)
    on_diag = rows == cols
    llt = jnp.where(on_diag, (l_col + r_col) - a_t, -a_t)   # LL^T  (BB,S,S)

    # ---- batched Gauss-Jordan inverse of LL^T --------------------------------
    # TODO(synk): torch.inverse has no Pallas primitive; Gauss-Jordan without
    # pivoting is valid here because LL^T is strictly diagonally dominant.
    sel_rows = lax.broadcasted_iota(jnp.int32, (1, S, 1), 1)
    sel_cols = lax.broadcasted_iota(jnp.int32, (1, 1, S), 2)
    inv0 = jnp.broadcast_to(jnp.where(on_diag, 1.0, 0.0), (BB, S, S))

    def gj_step(kk, carry):
        m_mat, inv_mat = carry
        sr = (sel_rows == kk).astype(jnp.float32)              # one-hot row k (1,S,1)
        sc = (sel_cols == kk).astype(jnp.float32)              # one-hot col k (1,1,S)
        row_m = jnp.sum(m_mat * sr, axis=1, keepdims=True)     # (BB,1,S) = M[k,:]
        row_i = jnp.sum(inv_mat * sr, axis=1, keepdims=True)   # (BB,1,S)
        piv = jnp.sum(row_m * sc, axis=2, keepdims=True)       # (BB,1,1) = M[k,k]
        inv_piv = 1.0 / piv
        row_m = row_m * inv_piv
        row_i = row_i * inv_piv
        col_m = jnp.sum(m_mat * sc, axis=2, keepdims=True)     # (BB,S,1) = M[:,k]
        factor = col_m - sr            # pivot row collapses to its normalized form
        return m_mat - factor * row_m, inv_mat - factor * row_i

    if S <= 16:                        # tiny static trip count: unroll in Python
        carry = (llt, inv0)
        for kk in range(S):
            carry = gj_step(kk, carry)
        minv = carry[1]
    else:
        _, minv = lax.fori_loop(0, S, gj_step, (llt, inv0))
    # minv = (LL^T)^-1 = (LL^-1)^T ;  one small XLU transpose gives LL^-1.
    ll_inv = jnp.swapaxes(minv, 1, 2)

    # ---- marginals + context -------------------------------------------------
    # Diagonal extracted once: one masked select + one lane reduce.
    diag_col = jnp.sum(jnp.where(on_diag, minv, 0.0), axis=2, keepdims=True)  # (BB,S,1)
    d0_ref[...] = jnp.swapaxes(r_col * diag_col, 1, 2)       # lane-dense (BB,1,S)

    # attn[i, j] = A[j, i] * (LLinv[i, i] - LLinv[i, j]); zero padded key cols j.
    attn = a_t * (diag_col - ll_inv)
    attn = jnp.where(m_row != 0.0, 0.0, attn)
    ctx_ref[...] = lax.dot_general(
        attn.astype(jnp.bfloat16), x.astype(jnp.bfloat16),
        (((2,), (1,)), ((0,), (0,))),
        preferred_element_type=jnp.float32)                  # (BB, S, H) f32


def _pick_block_batch(batch, seq):
    """Largest divisor of `batch` giving ~>=256 fused rows for the MXU."""
    target = max(1, 256 // max(seq, 1))
    bb = min(batch, target)
    while bb > 1 and batch % bb != 0:
        bb -= 1
    return max(bb, 1)


def structured_attention(x, mask, roots_label, root_mask, params):
    B, S, H = x.shape
    scale = 1.0 / math.sqrt(H)

    # Fuse Q (pre-scaled), K and root projections into one (H, 2H+1) weight so
    # the kernel issues a single bf16 MXU matmul over all BB*S rows.
    w_cat = jnp.concatenate(
        [params["wq"].T * scale, params["wk"].T, params["wr"].T], axis=1)
    w_cat = w_cat.astype(jnp.bfloat16)                                # (H, 2H+1)
    b_cat = jnp.concatenate(
        [params["bq"] * scale, params["bk"], params["br"]]).reshape(1, 2 * H + 1)
    b_cat = b_cat.astype(jnp.float32)

    # NOTE: assumes the BERT-style extended mask uses exactly -10000.0 fill.
    m_row = (mask[:, 0] / -10000.0).astype(jnp.float32)               # (B, 1, S)

    BB = _pick_block_batch(B, S)
    grid = (B // BB,)

    cost = pl.CostEstimate(
        flops=(2 * B * S * H * (2 * H + 1)       # fused projection
               + 4 * B * S * S * H               # scores + context matmuls
               + 4 * B * S * S * S),             # Gauss-Jordan updates
        transcendentals=B * S * (S + 2),         # exp(scores), exp(root), pivot recips
        bytes_accessed=(B * S * H * 4 + w_cat.size * 2 + b_cat.size * 4
                        + m_row.size * 4 + B * S * H * 4 + B * S * 4),
    )

    # Rough per-step VMEM need; only raise the scoped limit when the default
    # would be tight (matters on v7x with 64 MiB physical VMEM).
    step_bytes = (4 * BB * S * H * 4             # x in + ctx out, double-buffered
                  + 10 * BB * S * S * 4          # in-kernel (S,S) f32 temporaries
                  + 4 * BB * S * (2 * H + 1))    # projection temporary
    vmem_limit = None
    if step_bytes > 24 * 1024 * 1024:
        vmem_limit = min(2 * step_bytes, 96 * 1024 * 1024)

    context, d0_row = pl.pallas_call(
        _structured_attention_kernel,
        grid=grid,
        in_specs=[
            pl.BlockSpec((BB, S, H), lambda b: (b, 0, 0)),            # x
            pl.BlockSpec((H, 2 * H + 1), lambda b: (0, 0)),           # fused weights
            pl.BlockSpec((1, 2 * H + 1), lambda b: (0, 0)),           # fused bias
            pl.BlockSpec((BB, 1, S), lambda b: (b, 0, 0)),            # padding mask
        ],
        out_specs=(
            pl.BlockSpec((BB, S, H), lambda b: (b, 0, 0)),            # context
            pl.BlockSpec((BB, 1, S), lambda b: (b, 0, 0)),            # d0 (lane-dense)
        ),
        out_shape=(
            jax.ShapeDtypeStruct((B, S, H), jnp.float32),
            jax.ShapeDtypeStruct((B, 1, S), jnp.float32),
        ),
        compiler_params=pltpu.CompilerParams(
            dimension_semantics=("parallel",),
            vmem_limit_bytes=vmem_limit),
        cost_estimate=cost,
    )(x, w_cat, b_cat, m_row)

    d0 = d0_row[:, 0, :]                                              # (B, S)

    # TODO(synk): BCE root loss is a trivial scalar reduction; kept in plain JAX.
    active = root_mask.reshape(-1) == 1
    logits = jnp.clip(d0.reshape(-1), 1e-5, 1.0 - 1e-5)
    labels = jnp.where(active, roots_label.reshape(-1), 0.0)
    bce = -(labels * jnp.log(logits) + (1.0 - labels) * jnp.log(1.0 - logits))
    loss_root = (bce * root_mask.reshape(-1).astype(jnp.float32)).mean()
    return context, d0, loss_root


def reference(x, mask, roots_label, root_mask, params):
    """Pure-JAX mirror of the PyTorch forward, for validation."""
    H = x.shape[-1]
    S = x.shape[1]
    key = x @ params["wk"].T + params["bk"]
    query = (x @ params["wq"].T + params["bq"]) / math.sqrt(H)
    root = (x @ params["wr"].T + params["br"])[..., 0]
    scores = query @ jnp.swapaxes(key, 1, 2)
    m = mask[:, 0] / -10000.0
    root = jnp.maximum(root - m[:, 0] * 50.0, -40.0)
    scores = jnp.maximum(scores - m * 50.0 - jnp.swapaxes(m, 1, 2) * 50.0, -40.0)
    A = jnp.exp(scores)
    R = jnp.exp(root)
    L = jnp.sum(A, axis=1)
    eye = jnp.eye(S, dtype=x.dtype)
    LL = eye * (L + R)[:, None, :] - A
    LLinv = jnp.linalg.inv(LL)
    dg = jnp.diagonal(LLinv, axis1=1, axis2=2)
    d0 = R * dg
    d = A * dg[:, None, :] - A * jnp.swapaxes(LLinv, 1, 2)
    attn = jnp.swapaxes(d, 1, 2)
    attn = jnp.where(m != 0.0, 0.0, attn)
    context = attn @ x
    active = root_mask.reshape(-1) == 1
    logits = jnp.clip(d0.reshape(-1), 1e-5, 1.0 - 1e-5)
    labels = jnp.where(active, roots_label.reshape(-1), 0.0)
    bce = -(labels * jnp.log(logits) + (1.0 - labels) * jnp.log(1.0 - logits))
    loss_root = (bce * root_mask.reshape(-1).astype(jnp.float32)).mean()
    return context, d0, loss_root


if __name__ == "__main__":
    B, S, H = 2, 8, 32
    key = jax.random.PRNGKey(0)
    ks = jax.random.split(key, 10)
    x = jax.random.normal(ks[0], (B, S, H), jnp.float32)
    # Deterministic synthetic parameters (PyTorch Linear convention: (out, in)).
    params = {
        "wq": 0.1 * jax.random.normal(ks[1], (H, H), jnp.float32),
        "bq": 0.1 * jax.random.normal(ks[2], (H,), jnp.float32),
        "wk": 0.1 * jax.random.normal(ks[3], (H, H), jnp.float32),
        "bk": 0.1 * jax.random.normal(ks[4], (H,), jnp.float32),
        "wr": 0.1 * jax.random.normal(ks[5], (1, H), jnp.float32),
        "br": 0.1 * jax.random.normal(ks[6], (1,), jnp.float32),
    }
    # Valid-token mask: last 2 tokens of batch 1 are padding.
    valid = jnp.ones((B, S), jnp.float32).at[1, S - 2:].set(0.0)
    mask = ((1.0 - valid) * -10000.0).reshape(B, 1, 1, S)   # extended mask
    roots_label = (jax.random.uniform(ks[7], (B, S)) > 0.5).astype(jnp.float32)
    root_mask = valid

    ctx, d0, loss = jax.block_until_ready(
        structured_attention(x, mask, roots_label, root_mask, params))

    rctx, rd0, rloss = reference(x, mask, roots_label, root_mask, params)
    assert jnp.allclose(ctx, rctx, atol=5e-2, rtol=5e-2), "context mismatch"
    assert jnp.allclose(d0, rd0, atol=5e-2, rtol=5e-2), "d0 mismatch"
    assert jnp.allclose(loss, rloss, atol=5e-2, rtol=5e-2), "loss mismatch"
    print("KERNEL_OK")
</pallas_src>

<mosaic_0001>
module attributes {stable_mosaic.version = 11 : i64} {
  func.func @_structured_attention_kernel(%arg0: i32, %arg1: memref<2x8x32xf32, #tpu.memory_space<vmem>>, %arg2: memref<32x65xbf16, #tpu.memory_space<vmem>>, %arg3: memref<1x65xf32, #tpu.memory_space<vmem>>, %arg4: memref<2x1x8xf32, #tpu.memory_space<vmem>>, %arg5: memref<2x8x32xf32, #tpu.memory_space<vmem>>, %arg6: memref<2x1x8xf32, #tpu.memory_space<vmem>>) attributes {dimension_semantics = [#tpu.dimension_semantics<parallel>], iteration_bounds = array<i64: 1>, scalar_prefetch = 0 : i64, scratch_operands = 0 : i64, tpu.core_type = #tpu.core_type<tc>, window_params = [{transform_indices = @transform_0, window_bounds = array<i64: 2, 8, 32>}, {pipeline_mode = #tpu.pipeline_mode<synchronous>, transform_indices = @transform_1, window_bounds = array<i64: 32, 65>}, {pipeline_mode = #tpu.pipeline_mode<synchronous>, transform_indices = @transform_2, window_bounds = array<i64: 1, 65>}, {transform_indices = @transform_3, window_bounds = array<i64: 2, 1, 8>}, {transform_indices = @transform_4, window_bounds = array<i64: 2, 8, 32>}, {transform_indices = @transform_5, window_bounds = array<i64: 2, 1, 8>}]} {
    %c0 = arith.constant 0 : index
    %c0_0 = arith.constant 0 : index
    %c0_1 = arith.constant 0 : index
    %0 = vector.load %arg1[%c0, %c0_0, %c0_1] : memref<2x8x32xf32, #tpu.memory_space<vmem>>, vector<2x8x32xf32>
    %1 = vector.shape_cast %0 : vector<2x8x32xf32> to vector<16x32xf32>
    %2 = arith.truncf %1 : vector<16x32xf32> to vector<16x32xbf16>
    %c0_2 = arith.constant 0 : index
    %c0_3 = arith.constant 0 : index
    %3 = vector.load %arg2[%c0_2, %c0_3] : memref<32x65xbf16, #tpu.memory_space<vmem>>, vector<32x65xbf16>
    %cst = arith.constant dense<0.000000e+00> : vector<16x65xf32>
    %4 = tpu.matmul %2, %3, %cst {dimension_numbers = #tpu.dot_dimension_numbers<[1], [0], [0], [1], [0, 0, 1, 1], [], []>} : vector<16x32xbf16>, vector<32x65xbf16>, vector<16x65xf32> -> vector<16x65xf32>
    %c0_4 = arith.constant 0 : index
    %c0_5 = arith.constant 0 : index
    %5 = vector.load %arg3[%c0_4, %c0_5] : memref<1x65xf32, #tpu.memory_space<vmem>>, vector<1x65xf32>
    %6 = vector.broadcast %5 : vector<1x65xf32> to vector<16x65xf32>
    %7 = arith.addf %4, %6 : vector<16x65xf32>
    %8 = vector.extract_strided_slice %7 {offsets = [0, 0], sizes = [16, 32], strides = [1, 1]} : vector<16x65xf32> to vector<16x32xf32>
    %9 = vector.shape_cast %8 : vector<16x32xf32> to vector<2x8x32xf32>
    %10 = arith.truncf %9 : vector<2x8x32xf32> to vector<2x8x32xbf16>
    %11 = vector.extract_strided_slice %7 {offsets = [0, 32], sizes = [16, 32], strides = [1, 1]} : vector<16x65xf32> to vector<16x32xf32>
    %12 = vector.shape_cast %11 : vector<16x32xf32> to vector<2x8x32xf32>
    %13 = arith.truncf %12 : vector<2x8x32xf32> to vector<2x8x32xbf16>
    %14 = vector.extract_strided_slice %7 {offsets = [0, 64], sizes = [16, 1], strides = [1, 1]} : vector<16x65xf32> to vector<16x1xf32>
    %15 = vector.shape_cast %14 : vector<16x1xf32> to vector<2x8x1xf32>
    %cst_6 = arith.constant dense<0.000000e+00> : vector<2x8x8xf32>
    %16 = tpu.matmul %13, %10, %cst_6 {dimension_numbers = #tpu.dot_dimension_numbers<[2], [2], [1], [1], [0, 0, 0, 1, 1, 1], [0], [0]>} : vector<2x8x32xbf16>, vector<2x8x32xbf16>, vector<2x8x8xf32> -> vector<2x8x8xf32>
    %c0_7 = arith.constant 0 : index
    %c0_8 = arith.constant 0 : index
    %c0_9 = arith.constant 0 : index
    %17 = vector.load %arg4[%c0_7, %c0_8, %c0_9] : memref<2x1x8xf32, #tpu.memory_space<vmem>>, vector<2x1x8xf32>
    %18 = tpu.transpose %17, [0, 2, 1] : vector<2x1x8xf32> -> vector<2x8x1xf32>
    %cst_10 = arith.constant 5.000000e+01 : f32
    %19 = vector.broadcast %cst_10 : f32 to vector<2x8x1xf32>
    %20 = arith.mulf %18, %19 : vector<2x8x1xf32>
    %21 = arith.subf %15, %20 : vector<2x8x1xf32>
    %cst_11 = arith.constant -4.000000e+01 : f32
    %22 = vector.broadcast %cst_11 : f32 to vector<2x8x1xf32>
    %23 = arith.maximumf %21, %22 : vector<2x8x1xf32>
    %cst_12 = arith.constant 5.000000e+01 : f32
    %24 = vector.broadcast %cst_12 : f32 to vector<2x8x1xf32>
    %25 = arith.mulf %18, %24 : vector<2x8x1xf32>
    %26 = vector.broadcast %25 : vector<2x8x1xf32> to vector<2x8x8xf32>
    %27 = arith.subf %16, %26 : vector<2x8x8xf32>
    %cst_13 = arith.constant 5.000000e+01 : f32
    %28 = vector.broadcast %cst_13 : f32 to vector<2x1x8xf32>
    %29 = arith.mulf %17, %28 : vector<2x1x8xf32>
    %30 = vector.broadcast %29 : vector<2x1x8xf32> to vector<2x8x8xf32>
    %31 = arith.subf %27, %30 : vector<2x8x8xf32>
    %cst_14 = arith.constant -4.000000e+01 : f32
    %32 = vector.broadcast %cst_14 : f32 to vector<2x8x8xf32>
    %33 = arith.maximumf %31, %32 : vector<2x8x8xf32>
    %34 = math.exp %33 : vector<2x8x8xf32>
    %35 = math.exp %23 : vector<2x8x1xf32>
    %cst_15 = arith.constant dense<0.000000e+00> : vector<2x8xf32>
    %36 = vector.multi_reduction <add>, %34, %cst_15 [2] : vector<2x8x8xf32> to vector<2x8xf32>
    %37 = vector.shape_cast %36 : vector<2x8xf32> to vector<2x8x1xf32>
    %38 = tpu.iota {dimensions = array<i32: 1>} : vector<1x8x8xi32>
    %39 = tpu.iota {dimensions = array<i32: 2>} : vector<1x8x8xi32>
    %40 = arith.cmpi eq, %38, %39 : vector<1x8x8xi32>
    %41 = arith.addf %37, %35 : vector<2x8x1xf32>
    %42 = vector.broadcast %41 : vector<2x8x1xf32> to vector<2x8x8xf32>
    %43 = arith.subf %42, %34 : vector<2x8x8xf32>
    %cst_16 = arith.constant 0.000000e+00 : f32
    %44 = vector.broadcast %cst_16 : f32 to vector<2x8x8xf32>
    %45 = arith.subf %44, %34 : vector<2x8x8xf32>
    %46 = vector.shape_cast %40 : vector<1x8x8xi1> to vector<1x8x8xi1>
    %47 = vector.broadcast %46 : vector<1x8x8xi1> to vector<2x8x8xi1>
    %48 = arith.select %47, %43, %45 : vector<2x8x8xi1>, vector<2x8x8xf32>
    %49 = tpu.iota {dimensions = array<i32: 1>} : vector<1x8x1xi32>
    %50 = tpu.iota {dimensions = array<i32: 2>} : vector<1x1x8xi32>
    %cst_17 = arith.constant 1.000000e+00 : f32
    %cst_18 = arith.constant 0.000000e+00 : f32
    %51 = vector.broadcast %cst_17 : f32 to vector<1x8x8xf32>
    %52 = vector.broadcast %cst_18 : f32 to vector<1x8x8xf32>
    %53 = arith.select %40, %51, %52 : vector<1x8x8xi1>, vector<1x8x8xf32>
    %54 = vector.shape_cast %53 : vector<1x8x8xf32> to vector<1x8x8xf32>
    %55 = vector.broadcast %54 : vector<1x8x8xf32> to vector<2x8x8xf32>
    %c0_i32 = arith.constant 0 : i32
    %56 = vector.broadcast %c0_i32 : i32 to vector<1x8x1xi32>
    %57 = arith.cmpi eq, %49, %56 : vector<1x8x1xi32>
    %58 = arith.extui %57 : vector<1x8x1xi1> to vector<1x8x1xi32>
    %59 = arith.sitofp %58 : vector<1x8x1xi32> to vector<1x8x1xf32>
    %c0_i32_19 = arith.constant 0 : i32
    %60 = vector.broadcast %c0_i32_19 : i32 to vector<1x1x8xi32>
    %61 = arith.cmpi eq, %50, %60 : vector<1x1x8xi32>
    %62 = arith.extui %61 : vector<1x1x8xi1> to vector<1x1x8xi32>
    %63 = arith.sitofp %62 : vector<1x1x8xi32> to vector<1x1x8xf32>
    %64 = vector.broadcast %59 : vector<1x8x1xf32> to vector<2x8x8xf32>
    %65 = arith.mulf %48, %64 : vector<2x8x8xf32>
    %cst_20 = arith.constant dense<0.000000e+00> : vector<2x8xf32>
    %66 = vector.multi_reduction <add>, %65, %cst_20 [1] : vector<2x8x8xf32> to vector<2x8xf32>
    %67 = vector.shape_cast %66 : vector<2x8xf32> to vector<2x1x8xf32>
    %68 = vector.broadcast %59 : vector<1x8x1xf32> to vector<2x8x8xf32>
    %69 = arith.mulf %55, %68 : vector<2x8x8xf32>
    %cst_21 = arith.constant dense<0.000000e+00> : vector<2x8xf32>
    %70 = vector.multi_reduction <add>, %69, %cst_21 [1] : vector<2x8x8xf32> to vector<2x8xf32>
    %71 = vector.shape_cast %70 : vector<2x8xf32> to vector<2x1x8xf32>
    %72 = vector.broadcast %63 : vector<1x1x8xf32> to vector<2x1x8xf32>
    %73 = arith.mulf %67, %72 : vector<2x1x8xf32>
    %cst_22 = arith.constant dense<0.000000e+00> : vector<2x1xf32>
    %74 = vector.multi_reduction <add>, %73, %cst_22 [2] : vector<2x1x8xf32> to vector<2x1xf32>
    %75 = vector.shape_cast %74 : vector<2x1xf32> to vector<2x1x1xf32>
    %cst_23 = arith.constant 1.000000e+00 : f32
    %76 = vector.broadcast %cst_23 : f32 to vector<2x1x1xf32>
    %77 = arith.divf %76, %75 : vector<2x1x1xf32>
    %78 = vector.broadcast %77 : vector<2x1x1xf32> to vector<2x1x8xf32>
    %79 = arith.mulf %67, %78 : vector<2x1x8xf32>
    %80 = vector.broadcast %77 : vector<2x1x1xf32> to vector<2x1x8xf32>
    %81 = arith.mulf %71, %80 : vector<2x1x8xf32>
    %82 = vector.broadcast %63 : vector<1x1x8xf32> to vector<2x8x8xf32>
    %83 = arith.mulf %48, %82 : vector<2x8x8xf32>
    %cst_24 = arith.constant dense<0.000000e+00> : vector<2x8xf32>
    %84 = vector.multi_reduction <add>, %83, %cst_24 [2] : vector<2x8x8xf32> to vector<2x8xf32>
    %85 = vector.shape_cast %84 : vector<2x8xf32> to vector<2x8x1xf32>
    %86 = vector.broadcast %59 : vector<1x8x1xf32> to vector<2x8x1xf32>
    %87 = arith.subf %85, %86 : vector<2x8x1xf32>
    %88 = vector.broadcast %87 : vector<2x8x1xf32> to vector<2x8x8xf32>
    %89 = vector.broadcast %79 : vector<2x1x8xf32> to vector<2x8x8xf32>
    %90 = arith.mulf %88, %89 : vector<2x8x8xf32>
    %91 = arith.subf %48, %90 : vector<2x8x8xf32>
    %92 = vector.broadcast %87 : vector<2x8x1xf32> to vector<2x8x8xf32>
    %93 = vector.broadcast %81 : vector<2x1x8xf32> to vector<2x8x8xf32>
    %94 = arith.mulf %92, %93 : vector<2x8x8xf32>
    %95 = arith.subf %55, %94 : vector<2x8x8xf32>
    %c1_i32 = arith.constant 1 : i32
    %96 = vector.broadcast %c1_i32 : i32 to vector<1x8x1xi32>
    %97 = arith.cmpi eq, %49, %96 : vector<1x8x1xi32>
    %98 = arith.extui %97 : vector<1x8x1xi1> to vector<1x8x1xi32>
    %99 = arith.sitofp %98 : vector<1x8x1xi32> to vector<1x8x1xf32>
    %c1_i32_25 = arith.constant 1 : i32
    %100 = vector.broadcast %c1_i32_25 : i32 to vector<1x1x8xi32>
    %101 = arith.cmpi eq, %50, %100 : vector<1x1x8xi32>
    %102 = arith.extui %101 : vector<1x1x8xi1> to vector<1x1x8xi32>
    %103 = arith.sitofp %102 : vector<1x1x8xi32> to vector<1x1x8xf32>
    %104 = vector.broadcast %99 : vector<1x8x1xf32> to vector<2x8x8xf32>
    %105 = arith.mulf %91, %104 : vector<2x8x8xf32>
    %cst_26 = arith.constant dense<0.000000e+00> : vector<2x8xf32>
    %106 = vector.multi_reduction <add>, %105, %cst_26 [1] : vector<2x8x8xf32> to vector<2x8xf32>
    %107 = vector.shape_cast %106 : vector<2x8xf32> to vector<2x1x8xf32>
    %108 = vector.broadcast %99 : vector<1x8x1xf32> to vector<2x8x8xf32>
    %109 = arith.mulf %95, %108 : vector<2x8x8xf32>
    %cst_27 = arith.constant dense<0.000000e+00> : vector<2x8xf32>
    %110 = vector.multi_reduction <add>, %109, %cst_27 [1] : vector<2x8x8xf32> to vector<2x8xf32>
    %111 = vector.shape_cast %110 : vector<2x8xf32> to vector<2x1x8xf32>
    %112 = vector.broadcast %103 : vector<1x1x8xf32> to vector<2x1x8xf32>
    %113 = arith.mulf %107, %112 : vector<2x1x8xf32>
    %cst_28 = arith.constant dense<0.000000e+00> : vector<2x1xf32>
    %114 = vector.multi_reduction <add>, %113, %cst_28 [2] : vector<2x1x8xf32> to vector<2x1xf32>
    %115 = vector.shape_cast %114 : vector<2x1xf32> to vector<2x1x1xf32>
    %cst_29 = arith.constant 1.000000e+00 : f32
    %116 = vector.broadcast %cst_29 : f32 to vector<2x1x1xf32>
    %117 = arith.divf %116, %115 : vector<2x1x1xf32>
    %118 = vector.broadcast %117 : vector<2x1x1xf32> to vector<2x1x8xf32>
    %119 = arith.mulf %107, %118 : vector<2x1x8xf32>
    %120 = vector.broadcast %117 : vector<2x1x1xf32> to vector<2x1x8xf32>
    %121 = arith.mulf %111, %120 : vector<2x1x8xf32>
    %122 = vector.broadcast %103 : vector<1x1x8xf32> to vector<2x8x8xf32>
    %123 = arith.mulf %91, %122 : vector<2x8x8xf32>
    %cst_30 = arith.constant dense<0.000000e+00> : vector<2x8xf32>
    %124 = vector.multi_reduction <add>, %123, %cst_30 [2] : vector<2x8x8xf32> to vector<2x8xf32>
    %125 = vector.shape_cast %124 : vector<2x8xf32> to vector<2x8x1xf32>
    %126 = vector.broadcast %99 : vector<1x8x1xf32> to vector<2x8x1xf32>
    %127 = arith.subf %125, %126 : vector<2x8x1xf32>
    %128 = vector.broadcast %127 : vector<2x8x1xf32> to vector<2x8x8xf32>
    %129 = vector.broadcast %119 : vector<2x1x8xf32> to vector<2x8x8xf32>
    %130 = arith.mulf %128, %129 : vector<2x8x8xf32>
    %131 = arith.subf %91, %130 : vector<2x8x8xf32>
    %132 = vector.broadcast %127 : vector<2x8x1xf32> to vector<2x8x8xf32>
    %133 = vector.broadcast %121 : vector<2x1x8xf32> to vector<2x8x8xf32>
    %134 = arith.mulf %132, %133 : vector<2x8x8xf32>
    %135 = arith.subf %95, %134 : vector<2x8x8xf32>
    %c2_i32 = arith.constant 2 : i32
    %136 = vector.broadcast %c2_i32 : i32 to vector<1x8x1xi32>
    %137 = arith.cmpi eq, %49, %136 : vector<1x8x1xi32>
    %138 = arith.extui %137 : vector<1x8x1xi1> to vector<1x8x1xi32>
    %139 = arith.sitofp %138 : vector<1x8x1xi32> to vector<1x8x1xf32>
    %c2_i32_31 = arith.constant 2 : i32
    %140 = vector.broadcast %c2_i32_31 : i32 to vector<1x1x8xi32>
    %141 = arith.cmpi eq, %50, %140 : vector<1x1x8xi32>
    %142 = arith.extui %141 : vector<1x1x8xi1> to vector<1x1x8xi32>
    %143 = arith.sitofp %142 : vector<1x1x8xi32> to vector<1x1x8xf32>
    %144 = vector.broadcast %139 : vector<1x8x1xf32> to vector<2x8x8xf32>
    %145 = arith.mulf %131, %144 : vector<2x8x8xf32>
    %cst_32 = arith.constant dense<0.000000e+00> : vector<2x8xf32>
    %146 = vector.multi_reduction <add>, %145, %cst_32 [1] : vector<2x8x8xf32> to vector<2x8xf32>
    %147 = vector.shape_cast %146 : vector<2x8xf32> to vector<2x1x8xf32>
    %148 = vector.broadcast %139 : vector<1x8x1xf32> to vector<2x8x8xf32>
    %149 = arith.mulf %135, %148 : vector<2x8x8xf32>
    %cst_33 = arith.constant dense<0.000000e+00> : vector<2x8xf32>
    %150 = vector.multi_reduction <add>, %149, %cst_33 [1] : vector<2x8x8xf32> to vector<2x8xf32>
    %151 = vector.shape_cast %150 : vector<2x8xf32> to vector<2x1x8xf32>
    %152 = vector.broadcast %143 : vector<1x1x8xf32> to vector<2x1x8xf32>
    %153 = arith.mulf %147, %152 : vector<2x1x8xf32>
    %cst_34 = arith.constant dense<0.000000e+00> : vector<2x1xf32>
    %154 = vector.multi_reduction <add>, %153, %cst_34 [2] : vector<2x1x8xf32> to vector<2x1xf32>
    %155 = vector.shape_cast %154 : vector<2x1xf32> to vector<2x1x1xf32>
    %cst_35 = arith.constant 1.000000e+00 : f32
    %156 = vector.broadcast %cst_35 : f32 to vector<2x1x1xf32>
    %157 = arith.divf %156, %155 : vector<2x1x1xf32>
    %158 = vector.broadcast %157 : vector<2x1x1xf32> to vector<2x1x8xf32>
    %159 = arith.mulf %147, %158 : vector<2x1x8xf32>
    %160 = vector.broadcast %157 : vector<2x1x1xf32> to vector<2x1x8xf32>
    %161 = arith.mulf %151, %160 : vector<2x1x8xf32>
    %162 = vector.broadcast %143 : vector<1x1x8xf32> to vector<2x8x8xf32>
    %163 = arith.mulf %131, %162 : vector<2x8x8xf32>
    %cst_36 = arith.constant dense<0.000000e+00> : vector<2x8xf32>
    %164 = vector.multi_reduction <add>, %163, %cst_36 [2] : vector<2x8x8xf32> to vector<2x8xf32>
    %165 = vector.shape_cast %164 : vector<2x8xf32> to vector<2x8x1xf32>
    %166 = vector.broadcast %139 : vector<1x8x1xf32> to vector<2x8x1xf32>
    %167 = arith.subf %165, %166 : vector<2x8x1xf32>
    %168 = vector.broadcast %167 : vector<2x8x1xf32> to vector<2x8x8xf32>
    %169 = vector.broadcast %159 : vector<2x1x8xf32> to vector<2x8x8xf32>
    %170 = arith.mulf %168, %169 : vector<2x8x8xf32>
    %171 = arith.subf %131, %170 : vector<2x8x8xf32>
    %172 = vector.broadcast %167 : vector<2x8x1xf32> to vector<2x8x8xf32>
    %173 = vector.broadcast %161 : vector<2x1x8xf32> to vector<2x8x8xf32>
    %174 = arith.mulf %172, %173 : vector<2x8x8xf32>
    %175 = arith.subf %135, %174 : vector<2x8x8xf32>
    %c3_i32 = arith.constant 3 : i32
    %176 = vector.broadcast %c3_i32 : i32 to vector<1x8x1xi32>
    %177 = arith.cmpi eq, %49, %176 : vector<1x8x1xi32>
    %178 = arith.extui %177 : vector<1x8x1xi1> to vector<1x8x1xi32>
    %179 = arith.sitofp %178 : vector<1x8x1xi32> to vector<1x8x1xf32>
    %c3_i32_37 = arith.constant 3 : i32
    %180 = vector.broadcast %c3_i32_37 : i32 to vector<1x1x8xi32>
    %181 = arith.cmpi eq, %50, %180 : vector<1x1x8xi32>
    %182 = arith.extui %181 : vector<1x1x8xi1> to vector<1x1x8xi32>
    %183 = arith.sitofp %182 : vector<1x1x8xi32> to vector<1x1x8xf32>
    %184 = vector.broadcast %179 : vector<1x8x1xf32> to vector<2x8x8xf32>
    %185 = arith.mulf %171, %184 : vector<2x8x8xf32>
    %cst_38 = arith.constant dense<0.000000e+00> : vector<2x8xf32>
    %186 = vector.multi_reduction <add>, %185, %cst_38 [1] : vector<2x8x8xf32> to vector<2x8xf32>
    %187 = vector.shape_cast %186 : vector<2x8xf32> to vector<2x1x8xf32>
    %188 = vector.broadcast %179 : vector<1x8x1xf32> to vector<2x8x8xf32>
    %189 = arith.mulf %175, %188 : vector<2x8x8xf32>
    %cst_39 = arith.constant dense<0.000000e+00> : vector<2x8xf32>
    %190 = vector.multi_reduction <add>, %189, %cst_39 [1] : vector<2x8x8xf32> to vector<2x8xf32>
    %191 = vector.shape_cast %190 : vector<2x8xf32> to vector<2x1x8xf32>
    %192 = vector.broadcast %183 : vector<1x1x8xf32> to vector<2x1x8xf32>
    %193 = arith.mulf %187, %192 : vector<2x1x8xf32>
    %cst_40 = arith.constant dense<0.000000e+00> : vector<2x1xf32>
    %194 = vector.multi_reduction <add>, %193, %cst_40 [2] : vector<2x1x8xf32> to vector<2x1xf32>
    %195 = vector.shape_cast %194 : vector<2x1xf32> to vector<2x1x1xf32>
    %cst_41 = arith.constant 1.000000e+00 : f32
    %196 = vector.broadcast %cst_41 : f32 to vector<2x1x1xf32>
    %197 = arith.divf %196, %195 : vector<2x1x1xf32>
    %198 = vector.broadcast %197 : vector<2x1x1xf32> to vector<2x1x8xf32>
    %199 = arith.mulf %187, %198 : vector<2x1x8xf32>
    %200 = vector.broadcast %197 : vector<2x1x1xf32> to vector<2x1x8xf32>
    %201 = arith.mulf %191, %200 : vector<2x1x8xf32>
    %202 = vector.broadcast %183 : vector<1x1x8xf32> to vector<2x8x8xf32>
    %203 = arith.mulf %171, %202 : vector<2x8x8xf32>
    %cst_42 = arith.constant dense<0.000000e+00> : vector<2x8xf32>
    %204 = vector.multi_reduction <add>, %203, %cst_42 [2] : vector<2x8x8xf32> to vector<2x8xf32>
    %205 = vector.shape_cast %204 : vector<2x8xf32> to vector<2x8x1xf32>
    %206 = vector.broadcast %179 : vector<1x8x1xf32> to vector<2x8x1xf32>
    %207 = arith.subf %205, %206 : vector<2x8x1xf32>
    %208 = vector.broadcast %207 : vector<2x8x1xf32> to vector<2x8x8xf32>
    %209 = vector.broadcast %199 : vector<2x1x8xf32> to vector<2x8x8xf32>
    %210 = arith.mulf %208, %209 : vector<2x8x8xf32>
    %211 = arith.subf %171, %210 : vector<2x8x8xf32>
    %212 = vector.broadcast %207 : vector<2x8x1xf32> to vector<2x8x8xf32>
    %213 = vector.broadcast %201 : vector<2x1x8xf32> to vector<2x8x8xf32>
    %214 = arith.mulf %212, %213 : vector<2x8x8xf32>
    %215 = arith.subf %175, %214 : vector<2x8x8xf32>
    %c4_i32 = arith.constant 4 : i32
    %216 = vector.broadcast %c4_i32 : i32 to vector<1x8x1xi32>
    %217 = arith.cmpi eq, %49, %216 : vector<1x8x1xi32>
    %218 = arith.extui %217 : vector<1x8x1xi1> to vector<1x8x1xi32>
    %219 = arith.sitofp %218 : vector<1x8x1xi32> to vector<1x8x1xf32>
    %c4_i32_43 = arith.constant 4 : i32
    %220 = vector.broadcast %c4_i32_43 : i32 to vector<1x1x8xi32>
    %221 = arith.cmpi eq, %50, %220 : vector<1x1x8xi32>
    %222 = arith.extui %221 : vector<1x1x8xi1> to vector<1x1x8xi32>
    %223 = arith.sitofp %222 : vector<1x1x8xi32> to vector<1x1x8xf32>
    %224 = vector.broadcast %219 : vector<1x8x1xf32> to vector<2x8x8xf32>
    %225 = arith.mulf %211, %224 : vector<2x8x8xf32>
    %cst_44 = arith.constant dense<0.000000e+00> : vector<2x8xf32>
    %226 = vector.multi_reduction <add>, %225, %cst_44 [1] : vector<2x8x8xf32> to vector<2x8xf32>
    %227 = vector.shape_cast %226 : vector<2x8xf32> to vector<2x1x8xf32>
    %228 = vector.broadcast %219 : vector<1x8x1xf32> to vector<2x8x8xf32>
    %229 = arith.mulf %215, %228 : vector<2x8x8xf32>
    %cst_45 = arith.constant dense<0.000000e+00> : vector<2x8xf32>
    %230 = vector.multi_reduction <add>, %229, %cst_45 [1] : vector<2x8x8xf32> to vector<2x8xf32>
    %231 = vector.shape_cast %230 : vector<2x8xf32> to vector<2x1x8xf32>
    %232 = vector.broadcast %223 : vector<1x1x8xf32> to vector<2x1x8xf32>
    %233 = arith.mulf %227, %232 : vector<2x1x8xf32>
    %cst_46 = arith.constant dense<0.000000e+00> : vector<2x1xf32>
    %234 = vector.multi_reduction <add>, %233, %cst_46 [2] : vector<2x1x8xf32> to vector<2x1xf32>
    %235 = vector.shape_cast %234 : vector<2x1xf32> to vector<2x1x1xf32>
    %cst_47 = arith.constant 1.000000e+00 : f32
    %236 = vector.broadcast %cst_47 : f32 to vector<2x1x1xf32>
    %237 = arith.divf %236, %235 : vector<2x1x1xf32>
    %238 = vector.broadcast %237 : vector<2x1x1xf32> to vector<2x1x8xf32>
    %239 = arith.mulf %227, %238 : vector<2x1x8xf32>
    %240 = vector.broadcast %237 : vector<2x1x1xf32> to vector<2x1x8xf32>
    %241 = arith.mulf %231, %240 : vector<2x1x8xf32>
    %242 = vector.broadcast %223 : vector<1x1x8xf32> to vector<2x8x8xf32>
    %243 = arith.mulf %211, %242 : vector<2x8x8xf32>
    %cst_48 = arith.constant dense<0.000000e+00> : vector<2x8xf32>
    %244 = vector.multi_reduction <add>, %243, %cst_48 [2] : vector<2x8x8xf32> to vector<2x8xf32>
    %245 = vector.shape_cast %244 : vector<2x8xf32> to vector<2x8x1xf32>
    %246 = vector.broadcast %219 : vector<1x8x1xf32> to vector<2x8x1xf32>
    %247 = arith.subf %245, %246 : vector<2x8x1xf32>
    %248 = vector.broadcast %247 : vector<2x8x1xf32> to vector<2x8x8xf32>
    %249 = vector.broadcast %239 : vector<2x1x8xf32> to vector<2x8x8xf32>
    %250 = arith.mulf %248, %249 : vector<2x8x8xf32>
    %251 = arith.subf %211, %250 : vector<2x8x8xf32>
    %252 = vector.broadcast %247 : vector<2x8x1xf32> to vector<2x8x8xf32>
    %253 = vector.broadcast %241 : vector<2x1x8xf32> to vector<2x8x8xf32>
    %254 = arith.mulf %252, %253 : vector<2x8x8xf32>
    %255 = arith.subf %215, %254 : vector<2x8x8xf32>
    %c5_i32 = arith.constant 5 : i32
    %256 = vector.broadcast %c5_i32 : i32 to vector<1x8x1xi32>
    %257 = arith.cmpi eq, %49, %256 : vector<1x8x1xi32>
    %258 = arith.extui %257 : vector<1x8x1xi1> to vector<1x8x1xi32>
    %259 = arith.sitofp %258 : vector<1x8x1xi32> to vector<1x8x1xf32>
    %c5_i32_49 = arith.constant 5 : i32
    %260 = vector.broadcast %c5_i32_49 : i32 to vector<1x1x8xi32>
    %261 = arith.cmpi eq, %50, %260 : vector<1x1x8xi32>
    %262 = arith.extui %261 : vector<1x1x8xi1> to vector<1x1x8xi32>
    %263 = arith.sitofp %262 : vector<1x1x8xi32> to vector<1x1x8xf32>
    %264 = vector.broadcast %259 : vector<1x8x1xf32> to vector<2x8x8xf32>
    %265 = arith.mulf %251, %264 : vector<2x8x8xf32>
    %cst_50 = arith.constant dense<0.000000e+00> : vector<2x8xf32>
    %266 = vector.multi_reduction <add>, %265, %cst_50 [1] : vector<2x8x8xf32> to vector<2x8xf32>
    %267 = vector.shape_cast %266 : vector<2x8xf32> to vector<2x1x8xf32>
    %268 = vector.broadcast %259 : vector<1x8x1xf32> to vector<2x8x8xf32>
    %269 = arith.mulf %255, %268 : vector<2x8x8xf32>
    %cst_51 = arith.constant dense<0.000000e+00> : vector<2x8xf32>
    %270 = vector.multi_reduction <add>, %269, %cst_51 [1] : vector<2x8x8xf32> to vector<2x8xf32>
    %271 = vector.shape_cast %270 : vector<2x8xf32> to vector<2x1x8xf32>
    %272 = vector.broadcast %263 : vector<1x1x8xf32> to vector<2x1x8xf32>
    %273 = arith.mulf %267, %272 : vector<2x1x8xf32>
    %cst_52 = arith.constant dense<0.000000e+00> : vector<2x1xf32>
    %274 = vector.multi_reduction <add>, %273, %cst_52 [2] : vector<2x1x8xf32> to vector<2x1xf32>
    %275 = vector.shape_cast %274 : vector<2x1xf32> to vector<2x1x1xf32>
    %cst_53 = arith.constant 1.000000e+00 : f32
    %276 = vector.broadcast %cst_53 : f32 to vector<2x1x1xf32>
    %277 = arith.divf %276, %275 : vector<2x1x1xf32>
    %278 = vector.broadcast %277 : vector<2x1x1xf32> to vector<2x1x8xf32>
    %279 = arith.mulf %267, %278 : vector<2x1x8xf32>
    %280 = vector.broadcast %277 : vector<2x1x1xf32> to vector<2x1x8xf32>
    %281 = arith.mulf %271, %280 : vector<2x1x8xf32>
    %282 = vector.broadcast %263 : vector<1x1x8xf32> to vector<2x8x8xf32>
    %283 = arith.mulf %251, %282 : vector<2x8x8xf32>
    %cst_54 = arith.constant dense<0.000000e+00> : vector<2x8xf32>
    %284 = vector.multi_reduction <add>, %283, %cst_54 [2] : vector<2x8x8xf32> to vector<2x8xf32>
    %285 = vector.shape_cast %284 : vector<2x8xf32> to vector<2x8x1xf32>
    %286 = vector.broadcast %259 : vector<1x8x1xf32> to vector<2x8x1xf32>
    %287 = arith.subf %285, %286 : vector<2x8x1xf32>
    %288 = vector.broadcast %287 : vector<2x8x1xf32> to vector<2x8x8xf32>
    %289 = vector.broadcast %279 : vector<2x1x8xf32> to vector<2x8x8xf32>
    %290 = arith.mulf %288, %289 : vector<2x8x8xf32>
    %291 = arith.subf %251, %290 : vector<2x8x8xf32>
    %292 = vector.broadcast %287 : vector<2x8x1xf32> to vector<2x8x8xf32>
    %293 = vector.broadcast %281 : vector<2x1x8xf32> to vector<2x8x8xf32>
    %294 = arith.mulf %292, %293 : vector<2x8x8xf32>
    %295 = arith.subf %255, %294 : vector<2x8x8xf32>
    %c6_i32 = arith.constant 6 : i32
    %296 = vector.broadcast %c6_i32 : i32 to vector<1x8x1xi32>
    %297 = arith.cmpi eq, %49, %296 : vector<1x8x1xi32>
    %298 = arith.extui %297 : vector<1x8x1xi1> to vector<1x8x1xi32>
    %299 = arith.sitofp %298 : vector<1x8x1xi32> to vector<1x8x1xf32>
    %c6_i32_55 = arith.constant 6 : i32
    %300 = vector.broadcast %c6_i32_55 : i32 to vector<1x1x8xi32>
    %301 = arith.cmpi eq, %50, %300 : vector<1x1x8xi32>
    %302 = arith.extui %301 : vector<1x1x8xi1> to vector<1x1x8xi32>
    %303 = arith.sitofp %302 : vector<1x1x8xi32> to vector<1x1x8xf32>
    %304 = vector.broadcast %299 : vector<1x8x1xf32> to vector<2x8x8xf32>
    %305 = arith.mulf %291, %304 : vector<2x8x8xf32>
    %cst_56 = arith.constant dense<0.000000e+00> : vector<2x8xf32>
    %306 = vector.multi_reduction <add>, %305, %cst_56 [1] : vector<2x8x8xf32> to vector<2x8xf32>
    %307 = vector.shape_cast %306 : vector<2x8xf32> to vector<2x1x8xf32>
    %308 = vector.broadcast %299 : vector<1x8x1xf32> to vector<2x8x8xf32>
    %309 = arith.mulf %295, %308 : vector<2x8x8xf32>
    %cst_57 = arith.constant dense<0.000000e+00> : vector<2x8xf32>
    %310 = vector.multi_reduction <add>, %309, %cst_57 [1] : vector<2x8x8xf32> to vector<2x8xf32>
    %311 = vector.shape_cast %310 : vector<2x8xf32> to vector<2x1x8xf32>
    %312 = vector.broadcast %303 : vector<1x1x8xf32> to vector<2x1x8xf32>
    %313 = arith.mulf %307, %312 : vector<2x1x8xf32>
    %cst_58 = arith.constant dense<0.000000e+00> : vector<2x1xf32>
    %314 = vector.multi_reduction <add>, %313, %cst_58 [2] : vector<2x1x8xf32> to vector<2x1xf32>
    %315 = vector.shape_cast %314 : vector<2x1xf32> to vector<2x1x1xf32>
    %cst_59 = arith.constant 1.000000e+00 : f32
    %316 = vector.broadcast %cst_59 : f32 to vector<2x1x1xf32>
    %317 = arith.divf %316, %315 : vector<2x1x1xf32>
    %318 = vector.broadcast %317 : vector<2x1x1xf32> to vector<2x1x8xf32>
    %319 = arith.mulf %307, %318 : vector<2x1x8xf32>
    %320 = vector.broadcast %317 : vector<2x1x1xf32> to vector<2x1x8xf32>
    %321 = arith.mulf %311, %320 : vector<2x1x8xf32>
    %322 = vector.broadcast %303 : vector<1x1x8xf32> to vector<2x8x8xf32>
    %323 = arith.mulf %291, %322 : vector<2x8x8xf32>
    %cst_60 = arith.constant dense<0.000000e+00> : vector<2x8xf32>
    %324 = vector.multi_reduction <add>, %323, %cst_60 [2] : vector<2x8x8xf32> to vector<2x8xf32>
    %325 = vector.shape_cast %324 : vector<2x8xf32> to vector<2x8x1xf32>
    %326 = vector.broadcast %299 : vector<1x8x1xf32> to vector<2x8x1xf32>
    %327 = arith.subf %325, %326 : vector<2x8x1xf32>
    %328 = vector.broadcast %327 : vector<2x8x1xf32> to vector<2x8x8xf32>
    %329 = vector.broadcast %319 : vector<2x1x8xf32> to vector<2x8x8xf32>
    %330 = arith.mulf %328, %329 : vector<2x8x8xf32>
    %331 = arith.subf %291, %330 : vector<2x8x8xf32>
    %332 = vector.broadcast %327 : vector<2x8x1xf32> to vector<2x8x8xf32>
    %333 = vector.broadcast %321 : vector<2x1x8xf32> to vector<2x8x8xf32>
    %334 = arith.mulf %332, %333 : vector<2x8x8xf32>
    %335 = arith.subf %295, %334 : vector<2x8x8xf32>
    %c7_i32 = arith.constant 7 : i32
    %336 = vector.broadcast %c7_i32 : i32 to vector<1x8x1xi32>
    %337 = arith.cmpi eq, %49, %336 : vector<1x8x1xi32>
    %338 = arith.extui %337 : vector<1x8x1xi1> to vector<1x8x1xi32>
    %339 = arith.sitofp %338 : vector<1x8x1xi32> to vector<1x8x1xf32>
    %c7_i32_61 = arith.constant 7 : i32
    %340 = vector.broadcast %c7_i32_61 : i32 to vector<1x1x8xi32>
    %341 = arith.cmpi eq, %50, %340 : vector<1x1x8xi32>
    %342 = arith.extui %341 : vector<1x1x8xi1> to vector<1x1x8xi32>
    %343 = arith.sitofp %342 : vector<1x1x8xi32> to vector<1x1x8xf32>
    %344 = vector.broadcast %339 : vector<1x8x1xf32> to vector<2x8x8xf32>
    %345 = arith.mulf %331, %344 : vector<2x8x8xf32>
    %cst_62 = arith.constant dense<0.000000e+00> : vector<2x8xf32>
    %346 = vector.multi_reduction <add>, %345, %cst_62 [1] : vector<2x8x8xf32> to vector<2x8xf32>
    %347 = vector.shape_cast %346 : vector<2x8xf32> to vector<2x1x8xf32>
    %348 = vector.broadcast %339 : vector<1x8x1xf32> to vector<2x8x8xf32>
    %349 = arith.mulf %335, %348 : vector<2x8x8xf32>
    %cst_63 = arith.constant dense<0.000000e+00> : vector<2x8xf32>
    %350 = vector.multi_reduction <add>, %349, %cst_63 [1] : vector<2x8x8xf32> to vector<2x8xf32>
    %351 = vector.shape_cast %350 : vector<2x8xf32> to vector<2x1x8xf32>
    %352 = vector.broadcast %343 : vector<1x1x8xf32> to vector<2x1x8xf32>
    %353 = arith.mulf %347, %352 : vector<2x1x8xf32>
    %cst_64 = arith.constant dense<0.000000e+00> : vector<2x1xf32>
    %354 = vector.multi_reduction <add>, %353, %cst_64 [2] : vector<2x1x8xf32> to vector<2x1xf32>
    %355 = vector.shape_cast %354 : vector<2x1xf32> to vector<2x1x1xf32>
    %cst_65 = arith.constant 1.000000e+00 : f32
    %356 = vector.broadcast %cst_65 : f32 to vector<2x1x1xf32>
    %357 = arith.divf %356, %355 : vector<2x1x1xf32>
    %358 = vector.broadcast %357 : vector<2x1x1xf32> to vector<2x1x8xf32>
    %359 = arith.mulf %351, %358 : vector<2x1x8xf32>
    %360 = vector.broadcast %343 : vector<1x1x8xf32> to vector<2x8x8xf32>
    %361 = arith.mulf %331, %360 : vector<2x8x8xf32>
    %cst_66 = arith.constant dense<0.000000e+00> : vector<2x8xf32>
    %362 = vector.multi_reduction <add>, %361, %cst_66 [2] : vector<2x8x8xf32> to vector<2x8xf32>
    %363 = vector.shape_cast %362 : vector<2x8xf32> to vector<2x8x1xf32>
    %364 = vector.broadcast %339 : vector<1x8x1xf32> to vector<2x8x1xf32>
    %365 = arith.subf %363, %364 : vector<2x8x1xf32>
    %366 = vector.broadcast %365 : vector<2x8x1xf32> to vector<2x8x8xf32>
    %367 = vector.broadcast %359 : vector<2x1x8xf32> to vector<2x8x8xf32>
    %368 = arith.mulf %366, %367 : vector<2x8x8xf32>
    %369 = arith.subf %335, %368 : vector<2x8x8xf32>
    %370 = tpu.transpose %369, [0, 2, 1] : vector<2x8x8xf32> -> vector<2x8x8xf32>
    %cst_67 = arith.constant 0.000000e+00 : f32
    %371 = vector.shape_cast %40 : vector<1x8x8xi1> to vector<1x8x8xi1>
    %372 = vector.broadcast %371 : vector<1x8x8xi1> to vector<2x8x8xi1>
    %373 = vector.broadcast %cst_67 : f32 to vector<2x8x8xf32>
    %374 = arith.select %372, %369, %373 : vector<2x8x8xi1>, vector<2x8x8xf32>
    %cst_68 = arith.constant dense<0.000000e+00> : vector<2x8xf32>
    %375 = vector.multi_reduction <add>, %374, %cst_68 [2] : vector<2x8x8xf32> to vector<2x8xf32>
    %376 = vector.shape_cast %375 : vector<2x8xf32> to vector<2x8x1xf32>
    %377 = arith.mulf %35, %376 : vector<2x8x1xf32>
    %378 = tpu.transpose %377, [0, 2, 1] : vector<2x8x1xf32> -> vector<2x1x8xf32>
    %c0_69 = arith.constant 0 : index
    %c0_70 = arith.constant 0 : index
    %c0_71 = arith.constant 0 : index
    %379 = vector.load %arg6[%c0_69, %c0_70, %c0_71] : memref<2x1x8xf32, #tpu.memory_space<vmem>>, vector<2x1x8xf32>
    tpu.vector_store %arg6[%c0_69, %c0_70, %c0_71], %378 {strides = array<i32>} : memref<2x1x8xf32, #tpu.memory_space<vmem>>, vector<2x1x8xf32>,
    %380 = vector.broadcast %376 : vector<2x8x1xf32> to vector<2x8x8xf32>
    %381 = arith.subf %380, %370 : vector<2x8x8xf32>
    %382 = arith.mulf %34, %381 : vector<2x8x8xf32>
    %cst_72 = arith.constant 0.000000e+00 : f32
    %383 = vector.broadcast %cst_72 : f32 to vector<2x1x8xf32>
    %384 = arith.cmpf one, %17, %383 : vector<2x1x8xf32>
    %cst_73 = arith.constant 0.000000e+00 : f32
    %385 = vector.shape_cast %384 : vector<2x1x8xi1> to vector<2x1x8xi1>
    %386 = vector.broadcast %385 : vector<2x1x8xi1> to vector<2x8x8xi1>
    %387 = vector.broadcast %cst_73 : f32 to vector<2x8x8xf32>
    %388 = arith.select %386, %387, %382 : vector<2x8x8xi1>, vector<2x8x8xf32>
    %389 = arith.truncf %388 : vector<2x8x8xf32> to vector<2x8x8xbf16>
    %390 = arith.truncf %0 : vector<2x8x32xf32> to vector<2x8x32xbf16>
    %cst_74 = arith.constant dense<0.000000e+00> : vector<2x8x32xf32>
    %391 = tpu.matmul %389, %390, %cst_74 {dimension_numbers = #tpu.dot_dimension_numbers<[2], [1], [1], [2], [0, 0, 0, 1, 1, 2], [0], [0]>} : vector<2x8x8xbf16>, vector<2x8x32xbf16>, vector<2x8x32xf32> -> vector<2x8x32xf32>
    %c0_75 = arith.constant 0 : index
    %c0_76 = arith.constant 0 : index
    %c0_77 = arith.constant 0 : index
    %392 = vector.load %arg5[%c0_75, %c0_76, %c0_77] : memref<2x8x32xf32, #tpu.memory_space<vmem>>, vector<2x8x32xf32>
    tpu.vector_store %arg5[%c0_75, %c0_76, %c0_77], %391 {strides = array<i32>} : memref<2x8x32xf32, #tpu.memory_space<vmem>>, vector<2x8x32xf32>,
    return
  }
  func.func @transform_0(%arg0: i32) -> (i32, i32, i32) {
    %c0_i32 = arith.constant 0 : i32
    %c0_i32_0 = arith.constant 0 : i32
    %c0_i32_1 = arith.constant 0 : i32
    return %arg0, %c0_i32, %c0_i32_0 : i32, i32, i32
  }
  func.func @transform_1(%arg0: i32) -> (i32, i32) {
    %c0_i32 = arith.constant 0 : i32
    %c0_i32_0 = arith.constant 0 : i32
    %c0_i32_1 = arith.constant 0 : i32
    return %c0_i32, %c0_i32_0 : i32, i32
  }
  func.func @transform_2(%arg0: i32) -> (i32, i32) {
    %c0_i32 = arith.constant 0 : i32
    %c0_i32_0 = arith.constant 0 : i32
    %c0_i32_1 = arith.constant 0 : i32
    return %c0_i32, %c0_i32_0 : i32, i32
  }
  func.func @transform_3(%arg0: i32) -> (i32, i32, i32) {
    %c0_i32 = arith.constant 0 : i32
    %c0_i32_0 = arith.constant 0 : i32
    %c0_i32_1 = arith.constant 0 : i32
    return %arg0, %c0_i32, %c0_i32_0 : i32, i32, i32
  }
  func.func @transform_4(%arg0: i32) -> (i32, i32, i32) {
    %c0_i32 = arith.constant 0 : i32
    %c0_i32_0 = arith.constant 0 : i32
    %c0_i32_1 = arith.constant 0 : i32
    return %arg0, %c0_i32, %c0_i32_0 : i32, i32, i32
  }
  func.func @transform_5(%arg0: i32) -> (i32, i32, i32) {
    %c0_i32 = arith.constant 0 : i32
    %c0_i32_0 = arith.constant 0 : i32
    %c0_i32_1 = arith.constant 0 : i32
    return %arg0, %c0_i32, %c0_i32_0 : i32, i32, i32
  }
}

</mosaic_0001>

<llo_original>
// kernel: tpu_custom_call.1
$region0: #{tpu_custom_call.1}
  #allocation0 [shape = 'u32[]', space=smem, size = 0x4, offset = 0x4, fixed_abs, tag = 'smem constant byte address 0x4 - core index']
  #allocation1 [shape = 'u32[144,128]{1,0:T(1,128)}', space=vmem, size = 0x12000, scoped, tag = 'internal scratch']
  %s0 = inlined_call_operand.hbm [shape: f32[2,8,32], index: 0, kind: input, shape index: {}]
  %s1 = inlined_call_operand.hbm [shape: bf16[32,65], index: 1, kind: input, shape index: {}]
  %s2 = inlined_call_operand.vmem [shape: f32[1,65], index: 2, kind: input, shape index: {}]
  %s3 = inlined_call_operand.vmem [shape: f32[2,1,8], index: 3, kind: input, shape index: {}]
  %s4 = inlined_call_operand.hbm [shape: f32[2,8,32], index: 4, kind: output, shape index: {0}]
  %s5 = inlined_call_operand.hbm [shape: f32[2,1,8], index: 5, kind: output, shape index: {1}]
  %6 = xla_tuple %s4, %s5
  %s7 = sld [smem:[#allocation0]]
  $region42: #{tpu_custom_call.1} parent=0
    _
  %s9 = ssub.s32 1, %s7
  %s10 = scalar_select 0, %s9, %s7
  $region1: #{tpu_custom_call.1} parent=0
    #allocation2 [shape = 'u8[8192]{0}', space=vmem, size = 0x2000, scoped, tag = 'input window, operand 0, single buffered']
    #allocation3 [shape = 's32[1]{0}', space=sflag, size = 0x4, scoped, tag = 'scoped memory for tpu_custom_call.1']
    #allocation4 [shape = 's32[1]{0}', space=sflag, size = 0x4, scoped, tag = 'scoped memory for tpu_custom_call.1']
    #allocation5 [shape = 'u8[8192]{0}', space=vmem, size = 0x2000, scoped, tag = 'input window, operand 1, single buffered']
    #allocation6 [shape = 's32[1]{0}', space=sflag, size = 0x4, scoped, tag = 'scoped memory for tpu_custom_call.1']
    #allocation7 [shape = 'u8[8192]{0}', space=vmem, size = 0x2000, scoped, tag = 'output window, operand 0, single buffered']
    #allocation8 [shape = 'u8[1024]{0}', space=vmem, size = 0x400, scoped, tag = 'output window, operand 1, single buffered']
    #allocation9 [shape = 's32[1]{0}', space=sflag, size = 0x4, scoped, tag = 'scoped memory for tpu_custom_call.1']
    %11 = vsyncpa [#allocation3], 0
    %12 = vsyncpa [#allocation6], 0
    %13 = vsyncpa [#allocation4], 0
    %14 = vsyncpa [#allocation9], 0
    // Predicated region
    $region2: #{tpu_custom_call.1} parent=1 // pred_check
      _
    $region3: #{tpu_custom_call.1} parent=1 // pred_check_branch
      %16 = sbr.rel (0) target = $region5
    $region4: #{tpu_custom_call.1} parent=1 // pred_region
      %s18 = ssub.s32 256, 256
      %19 = vsyncadd [#allocation3], %s18
      %s20 = sshll.u32 [#allocation2], 4
      %s21 = int_to_ptr.vmem [resolvable:$true] %s20
      %26 = dma.hbm_to_vmem [thread:$0]  %s0, 256, %s21, [#allocation3], 128, 128, 8
    $region5: #{tpu_custom_call.1} parent=1 // pred_fallthru
      _
    // Predicated region
    $region6: #{tpu_custom_call.1} parent=1 // pred_check
      _
    $region7: #{tpu_custom_call.1} parent=1 // pred_check_branch
      %28 = sbr.rel (0) target = $region9
    $region8: #{tpu_custom_call.1} parent=1 // pred_region
      %s30 = ssub.s32 256, 256
      %31 = vsyncadd [#allocation6], %s30
      %s32 = sshll.u32 [#allocation5], 4
      %s33 = int_to_ptr.vmem [resolvable:$true] %s32
      %38 = dma.hbm_to_vmem [thread:$0]  %s1, 256, %s33, [#allocation6], 64, 64, 4
    $region9: #{tpu_custom_call.1} parent=1 // pred_fallthru
      _
    // Predicated region
    $region10: #{tpu_custom_call.1} parent=1 // pred_check
      _
    $region11: #{tpu_custom_call.1} parent=1 // pred_check_branch
      %40 = sbr.rel (0) target = $region13
    $region12: #{tpu_custom_call.1} parent=1 // pred_region
      _
    $region13: #{tpu_custom_call.1} parent=1 // pred_fallthru
      _
    // Predicated region
    $region14: #{tpu_custom_call.1} parent=1 // pred_check
      _
    $region15: #{tpu_custom_call.1} parent=1 // pred_check_branch
      %42 = sbr.rel (0) target = $region17
    $region16: #{tpu_custom_call.1} parent=1 // pred_region
      _
    $region17: #{tpu_custom_call.1} parent=1 // pred_fallthru
      _
    // Predicated region
    $region18: #{tpu_custom_call.1} parent=1 // pred_check
      _
    $region19: #{tpu_custom_call.1} parent=1 // pred_check_branch
      %44 = sbr.rel (0) target = $region21
    $region20: #{tpu_custom_call.1} parent=1 // pred_region
      %45 = dma.done [#allocation3], 256
    $region21: #{tpu_custom_call.1} parent=1 // pred_fallthru
      _
    // Predicated region
    $region22: #{tpu_custom_call.1} parent=1 // pred_check
      _
    $region23: #{tpu_custom_call.1} parent=1 // pred_check_branch
      %47 = sbr.rel (0) target = $region25
    $region24: #{tpu_custom_call.1} parent=1 // pred_region
      %48 = dma.done [#allocation6], 256
    $region25: #{tpu_custom_call.1} parent=1 // pred_fallthru
      _
    %v50 = vld [vmem:[#allocation2] sm:$0xff]
    %v51 = vld [vmem:[#allocation2 + $0x8] sm:$0xff]
    %v52 = vpack.c.bf16 %v51, %v50
    %v53 = vld [vmem:[#allocation5] sm:$0xf]
    %v54 = vld [vmem:[#allocation5 + $0x4] sm:$0xf]
    %v55 = vld [vmem:[#allocation5 + $0x8] sm:$0xf]
    %v56 = vld [vmem:[#allocation5 + $0xc] sm:$0xf]
    %v57 = vld [vmem:[%s2] sm:$0x1]
    %v59 = vlaneseq
    %v60 = vshrl.u32 %v59, 7
    %v61 = vsub.s32 0, %v60
    %v62 = vrot.slane %v57, %v61
    %v68 = vunpack.c.l.b16 %v53
    %v69 = vunpack.c.l.b16 %v54
    %v70 = vunpack.c.l.b16 %v55
    %v71 = vunpack.c.l.b16 %v56
    %v72 = vpack.c.b16 %v69, %v68
    %v73 = vpack.c.b16 %v71, %v70
    %vm76 = vcmask 261120
    %v78 = vsel %vm76, %v52, 0
    %80 = vmatprep.subr.bf16.mxu0 0
    %81 = vmatpush1.bf16.msra.mxu0 0
    %82 = vmatprep.subr.bf16.mxu0 0
    %83 = vmatpush1.bf16.msra.mxu0 0
    %84 = vmatprep.subr.bf16.mxu0 0
    %85 = vmatpush1.bf16.msra.mxu0 0
    %86 = vmatprep.subr.bf16.mxu0 0
    %87 = vmatpush1.bf16.msra.mxu0 0
    %88 = vmatprep.subr.bf16.mxu0 0
    %89 = vmatpush1.bf16.msra.mxu0 0
    %90 = vmatprep.subr.bf16.mxu0 0
    %91 = vmatpush1.bf16.msra.mxu0 0
    %92 = vmatprep.subr.bf16.mxu0 0
    %93 = vmatpush1.bf16.msra.mxu0 %v73
    %94 = vmatprep.subr.bf16.mxu0 0
    %95 = vmatpush1.bf16.msra.mxu0 %v72
    %96 = vmatprep.subr.bf16.mxu0 0
    %97 = vmatpush2.bf16.msra.mxu0 0
    %98 = vmatprep.subr.bf16.mxu0 0
    %99 = vmatpush2.bf16.msra.mxu0 0
    %100 = vmatprep.subr.bf16.mxu0 0
    %101 = vmatpush2.bf16.msra.mxu0 0
    %102 = vmatprep.subr.bf16.mxu0 0
    %103 = vmatpush2.bf16.msra.mxu0 0
    %104 = vmatprep.subr.bf16.mxu0 0
    %105 = vmatpush2.bf16.msra.mxu0 0
    %106 = vmatprep.subr.bf16.mxu0 0
    %107 = vmatpush2.bf16.msra.mxu0 0
    %108 = vmatprep.subr.bf16.mxu0 0
    %109 = vmatpush2.bf16.msra.mxu0 0
    %110 = vmatprep.subr.bf16.mxu0 0
    %111 = vmatpush2.bf16.msra.mxu0 0
    %112 = vmatprep.mubr.bf16.mxu0 0
    %113 = vmatmul.mubr.bf16.gmra.mxu0 %v78
    %v114 = vpop.f32.mrf.mxu0
    %v115 = vadd.f32 %v62, %v114
    %v116 = vpop.f32.mrf.mxu0
    %v117 = vpop.f32.mrf.mxu0
    %v118 = vadd.f32 %v62, %v117
    %v119 = vpop.f32.mrf.mxu0
    %120 = vdwg.mxu0
    %v121 = vpack.c.bf16 %v115, %v115
    %v122 = vpack.c.bf16 %v118, %v118
    %124 = vrot.lane.b32.xlu0 %v121, 96
    %v125 = vpop.permute.xlu0 %124
    %v127 = vsel %vm76, %v125, 0
    %v130 = vsel %vm76, %v121, 0
    %132 = vmatprep.subr.bf16.mxu0 0
    %133 = vmatpush1.bf16.xpose.msra.mxu0 0
    %134 = vmatprep.subr.bf16.mxu0 0
    %135 = vmatpush1.bf16.xpose.msra.mxu0 0
    %136 = vmatprep.subr.bf16.mxu0 0
    %137 = vmatpush1.bf16.xpose.msra.mxu0 0
    %138 = vmatprep.subr.bf16.mxu0 0
    %139 = vmatpush1.bf16.xpose.msra.mxu0 0
    %140 = vmatprep.subr.bf16.mxu0 0
    %141 = vmatpush1.bf16.xpose.msra.mxu0 0
    %142 = vmatprep.subr.bf16.mxu0 0
    %143 = vmatpush1.bf16.xpose.msra.mxu0 0
    %144 = vmatprep.subr.bf16.mxu0 0
    %145 = vmatpush1.bf16.xpose.msra.mxu0 0
    %146 = vmatprep.subr.bf16.mxu0 0
    %147 = vmatpush1.bf16.xpose.msra.mxu0 %v130
    %148 = vmatprep.subr.bf16.mxu0 0
    %149 = vmatpush2.bf16.xpose.msra.mxu0 0
    %150 = vmatprep.subr.bf16.mxu0 0
    %151 = vmatpush2.bf16.xpose.msra.mxu0 0
    %152 = vmatprep.subr.bf16.mxu0 0
    %153 = vmatpush2.bf16.xpose.msra.mxu0 0
    %154 = vmatprep.subr.bf16.mxu0 0
    %155 = vmatpush2.bf16.xpose.msra.mxu0 0
    %156 = vmatprep.subr.bf16.mxu0 0
    %157 = vmatpush2.bf16.xpose.msra.mxu0 0
    %158 = vmatprep.subr.bf16.mxu0 0
    %159 = vmatpush2.bf16.xpose.msra.mxu0 0
    %160 = vmatprep.subr.bf16.mxu0 0
    %161 = vmatpush2.bf16.xpose.msra.mxu0 0
    %162 = vmatprep.subr.bf16.mxu0 0
    %163 = vmatpush2.bf16.xpose.msra.mxu0 0
    %164 = vmatprep.mubr.bf16.mxu0 0
    %165 = vmatmul.mubr.bf16.gmra.mxu0 %v127
    %v166 = vpop.f32.mrf.mxu0
    %v167 = vadd.f32 0.0, %v166
    %v168 = vpop.f32.mrf.mxu0
    %v169 = vpop.f32.mrf.mxu0
    %v170 = vpop.f32.mrf.mxu0
    %171 = vdwg.mxu0
    %173 = vrot.lane.b32.xlu0 %v122, 96
    %v174 = vpop.permute.xlu0 %173
    %v176 = vsel %vm76, %v174, 0
    %v179 = vsel %vm76, %v122, 0
    %181 = vmatprep.subr.bf16.mxu0 0
    %182 = vmatpush1.bf16.xpose.msra.mxu0 0
    %183 = vmatprep.subr.bf16.mxu0 0
    %184 = vmatpush1.bf16.xpose.msra.mxu0 0
    %185 = vmatprep.subr.bf16.mxu0 0
    %186 = vmatpush1.bf16.xpose.msra.mxu0 0
    %187 = vmatprep.subr.bf16.mxu0 0
    %188 = vmatpush1.bf16.xpose.msra.mxu0 0
    %189 = vmatprep.subr.bf16.mxu0 0
    %190 = vmatpush1.bf16.xpose.msra.mxu0 0
    %191 = vmatprep.subr.bf16.mxu0 0
    %192 = vmatpush1.bf16.xpose.msra.mxu0 0
    %193 = vmatprep.subr.bf16.mxu0 0
    %194 = vmatpush1.bf16.xpose.msra.mxu0 0
    %195 = vmatprep.subr.bf16.mxu0 0
    %196 = vmatpush1.bf16.xpose.msra.mxu0 %v179
    %197 = vmatprep.subr.bf16.mxu0 0
    %198 = vmatpush2.bf16.xpose.msra.mxu0 0
    %199 = vmatprep.subr.bf16.mxu0 0
    %200 = vmatpush2.bf16.xpose.msra.mxu0 0
    %201 = vmatprep.subr.bf16.mxu0 0
    %202 = vmatpush2.bf16.xpose.msra.mxu0 0
    %203 = vmatprep.subr.bf16.mxu0 0
    %204 = vmatpush2.bf16.xpose.msra.mxu0 0
    %205 = vmatprep.subr.bf16.mxu0 0
    %206 = vmatpush2.bf16.xpose.msra.mxu0 0
    %207 = vmatprep.subr.bf16.mxu0 0
    %208 = vmatpush2.bf16.xpose.msra.mxu0 0
    %209 = vmatprep.subr.bf16.mxu0 0
    %210 = vmatpush2.bf16.xpose.msra.mxu0 0
    %211 = vmatprep.subr.bf16.mxu0 0
    %212 = vmatpush2.bf16.xpose.msra.mxu0 0
    %213 = vmatprep.mubr.bf16.mxu0 0
    %214 = vmatmul.mubr.bf16.gmra.mxu0 %v176
    %v215 = vpop.f32.mrf.mxu0
    %v216 = vadd.f32 0.0, %v215
    %v217 = vpop.f32.mrf.mxu0
    %v218 = vpop.f32.mrf.mxu0
    %v219 = vpop.f32.mrf.mxu0
    %220 = vdwg.mxu0
    %v221 = vld [vmem:[%s3] sm:$0x1]
    %v222 = vld [vmem:[%s3 + $0x1] sm:$0x1]
    %223 = vxpose.xlu0.b32.start [1/16] %v221, 128
    %224 = vxpose.xlu0.b32.cont [2/16] 0.0, 128
    %225 = vxpose.xlu0.b32.cont [3/16] 0.0, 128
    %226 = vxpose.xlu0.b32.cont [4/16] 0.0, 128
    %227 = vxpose.xlu0.b32.cont [5/16] 0.0, 128
    %228 = vxpose.xlu0.b32.cont [6/16] 0.0, 128
    %229 = vxpose.xlu0.b32.cont [7/16] 0.0, 128
    %230 = vxpose.xlu0.b32.cont [8/16] 0.0, 128
    %231 = vxpose.xlu0.b32.cont [9/16] 0.0, 128
    %232 = vxpose.xlu0.b32.cont [10/16] 0.0, 128
    %233 = vxpose.xlu0.b32.cont [11/16] 0.0, 128
    %234 = vxpose.xlu0.b32.cont [12/16] 0.0, 128
    %235 = vxpose.xlu0.b32.cont [13/16] 0.0, 128
    %236 = vxpose.xlu0.b32.cont [14/16] 0.0, 128
    %237 = vxpose.xlu0.b32.cont [15/16] 0.0, 128
    %238 = vxpose.xlu0.b32.end [16/16] 0.0, 128
    %v239 = vpop.trf.xlu0
    %v240 = vpop.trf.xlu0
    %v241 = vpop.trf.xlu0
    %v242 = vpop.trf.xlu0
    %v243 = vpop.trf.xlu0
    %v244 = vpop.trf.xlu0
    %v245 = vpop.trf.xlu0
    %v246 = vpop.trf.xlu0
    %v247 = vpop.trf.xlu0
    %v248 = vpop.trf.xlu0
    %v249 = vpop.trf.xlu0
    %v250 = vpop.trf.xlu0
    %v251 = vpop.trf.xlu0
    %v252 = vpop.trf.xlu0
    %v253 = vpop.trf.xlu0
    %v254 = vpop.trf.xlu0
    %255 = vxpose.xlu0.b32.start [1/16] %v222, 128
    %256 = vxpose.xlu0.b32.cont [2/16] 0.0, 128
    %257 = vxpose.xlu0.b32.cont [3/16] 0.0, 128
    %258 = vxpose.xlu0.b32.cont [4/16] 0.0, 128
    %259 = vxpose.xlu0.b32.cont [5/16] 0.0, 128
    %260 = vxpose.xlu0.b32.cont [6/16] 0.0, 128
    %261 = vxpose.xlu0.b32.cont [7/16] 0.0, 128
    %262 = vxpose.xlu0.b32.cont [8/16] 0.0, 128
    %263 = vxpose.xlu0.b32.cont [9/16] 0.0, 128
    %264 = vxpose.xlu0.b32.cont [10/16] 0.0, 128
    %265 = vxpose.xlu0.b32.cont [11/16] 0.0, 128
    %266 = vxpose.xlu0.b32.cont [12/16] 0.0, 128
    %267 = vxpose.xlu0.b32.cont [13/16] 0.0, 128
    %268 = vxpose.xlu0.b32.cont [14/16] 0.0, 128
    %269 = vxpose.xlu0.b32.cont [15/16] 0.0, 128
    %270 = vxpose.xlu0.b32.end [16/16] 0.0, 128
    %v271 = vpop.trf.xlu0
    %v272 = vpop.trf.xlu0
    %v273 = vpop.trf.xlu0
    %v274 = vpop.trf.xlu0
    %v275 = vpop.trf.xlu0
    %v276 = vpop.trf.xlu0
    %v277 = vpop.trf.xlu0
    %v278 = vpop.trf.xlu0
    %v279 = vpop.trf.xlu0
    %v280 = vpop.trf.xlu0
    %v281 = vpop.trf.xlu0
    %v282 = vpop.trf.xlu0
    %v283 = vpop.trf.xlu0
    %v284 = vpop.trf.xlu0
    %v285 = vpop.trf.xlu0
    %v286 = vpop.trf.xlu0
    %v287 = vmul.f32 %v239, 50.0
    %v288 = vmul.f32 %v271, 50.0
    %291 = vrot.lane.b32.xlu0 %v287, 64
    %v292 = vpop.permute.xlu0 %291
    %293 = vrot.lane.b32.xlu0 %v288, 64
    %v294 = vpop.permute.xlu0 %293
    %v297 = vsub.f32 %v115, %v292
    %v298 = vsub.f32 %v118, %v294
    %v299 = vmax.f32 %v297, -40.0
    %v300 = vmax.f32 %v298, -40.0
    %301 = vset.pattern.permute.xlu0 0
    %302 = vperm.xlu0 %301, %v287
    %v303 = vpop.permute.xlu0 %302
    %305 = vset.pattern.permute.xlu0 0
    %306 = vperm.xlu0 %305, %v288
    %v307 = vpop.permute.xlu0 %306
    %v309 = vsub.f32 %v167, %v303
    %v310 = vsub.f32 %v216, %v307
    %v311 = vmul.f32 %v221, 50.0
    %v312 = vmul.f32 %v222, 50.0
    %v315 = vlaneseq
    %v316 = vshrl.u32 %v315, 7
    %v317 = vsub.s32 0, %v316
    %v318 = vrot.slane %v311, %v317
    %v319 = vlaneseq
    %v320 = vshrl.u32 %v319, 7
    %v321 = vsub.s32 0, %v320
    %v322 = vrot.slane %v312, %v321
    %v325 = vsub.f32 %v309, %v318
    %v326 = vsub.f32 %v310, %v322
    %v327 = vmax.f32 %v325, -40.0
    %v328 = vmax.f32 %v326, -40.0
    %v329 = vmul.f32 %v327, 1.442695
    %v330 = vpow.pop %v329
    %v331 = vmul.f32 %v328, 1.442695
    %v332 = vpow.pop %v331
    %v333 = vmul.f32 %v299, 1.442695
    %v334 = vpow.pop %v333
    %v335 = vmul.f32 %v300, 1.442695
    %v336 = vpow.pop %v335
    %vm337 = vcmask 64512
    %v338 = vsel %vm337, %v330, 0.0
    %339 = vadd.xlane.f32.xlu0 %v338
    %v340 = vpop.xlane.xlu0 %339
    %v341 = vsel %vm337, %v332, 0.0
    %342 = vadd.xlane.f32.xlu0 %v341
    %v343 = vpop.xlane.xlu0 %342
    %v344 = vlaneseq
    %v345 = vshrl.u32 %v344, 7
    %v346 = vlaneseq
    %v347 = vand.u32 %v346, 127
    %vm348 = vcmp.eq.s32.totalorder %v345, %v347
    %v349 = vadd.f32 %v340, %v334
    %v350 = vadd.f32 %v343, %v336
    %352 = vset.pattern.permute.xlu0 64
    %353 = vperm.xlu0 %352, %v349
    %v354 = vpop.permute.xlu0 %353
    %357 = vset.pattern.permute.xlu0 64
    %358 = vperm.xlu0 %357, %v350
    %v359 = vpop.permute.xlu0 %358
    %v361 = vsub.f32 %v354, %v330
    %v362 = vsub.f32 %v359, %v332
    %v363 = vsub.f32 0.0, %v330
    %v364 = vsub.f32 0.0, %v332
    %v365 = vsel %vm348, 1, 0
    %vm366 = vcmp.eq.s32.totalorder %v365, 1
    %v367 = vsel %vm366, %v361, %v363
    %v368 = vsel %vm366, %v362, %v364
    %v369 = vsel %vm348, 1.0, 0.0
    %vm370 = vcmp.eq.s32.totalorder %v345, 0
    %v371 = vsel %vm370, 1, 0
    %v372 = vcvt.s32.f32 %v371
    %vm373 = vcmp.eq.s32.totalorder %v347, 0
    %v374 = vsel %vm373, 1, 0
    %v375 = vcvt.s32.f32 %v374
    %v376 = vmul.f32 %v367, %v372
    %v377 = vmul.f32 %v368, %v372
    %v378 = vsel %vm337, %v376, 0.0
    %v379 = vrot.slane %v378, 4
    %v380 = vadd.f32 %v378, %v379
    %v381 = vrot.slane %v380, 2
    %v382 = vadd.f32 %v380, %v381
    %v383 = vrot.slane %v382, 1
    %v384 = vadd.f32 %v382, %v383
    %v385 = vsel %vm337, %v377, 0.0
    %v386 = vrot.slane %v385, 4
    %v387 = vadd.f32 %v385, %v386
    %v388 = vrot.slane %v387, 2
    %v389 = vadd.f32 %v387, %v388
    %v390 = vrot.slane %v389, 1
    %v391 = vadd.f32 %v389, %v390
    %v392 = vmul.f32 %v369, %v372
    %v393 = vsel %vm337, %v392, 0.0
    %v394 = vrot.slane %v393, 4
    %v395 = vadd.f32 %v393, %v394
    %v396 = vrot.slane %v395, 2
    %v397 = vadd.f32 %v395, %v396
    %v398 = vrot.slane %v397, 1
    %v399 = vadd.f32 %v397, %v398
    %v400 = vmul.f32 %v384, %v375
    %v401 = vmul.f32 %v391, %v375
    %v402 = vsel %vm337, %v400, 0.0
    %403 = vadd.xlane.f32.xlu0 %v402
    %v404 = vpop.xlane.xlu0 %403
    %v405 = vsel %vm337, %v401, 0.0
    %406 = vadd.xlane.f32.xlu0 %v405
    %v407 = vpop.xlane.xlu0 %406
    %v408 = vrcp.pop %v404
    %v409 = vmul.f32 1.0, %v408
    %v410 = vrcp.pop %v407
    %v411 = vmul.f32 1.0, %v410
    %v412 = vmul.f32 %v384, %v409
    %v413 = vmul.f32 %v391, %v411
    %v414 = vmul.f32 %v399, %v409
    %v415 = vmul.f32 %v399, %v411
    %v416 = vmul.f32 %v367, %v375
    %v417 = vmul.f32 %v368, %v375
    %v418 = vsel %vm337, %v416, 0.0
    %419 = vadd.xlane.f32.xlu0 %v418
    %v420 = vpop.xlane.xlu0 %419
    %v421 = vsel %vm337, %v417, 0.0
    %422 = vadd.xlane.f32.xlu0 %v421
    %v423 = vpop.xlane.xlu0 %422
    %v424 = vsub.f32 %v420, %v372
    %v425 = vsub.f32 %v423, %v372
    %v426 = vmul.f32 %v424, %v412
    %v427 = vmul.f32 %v425, %v413
    %v428 = vsub.f32 %v367, %v426
    %v429 = vsub.f32 %v368, %v427
    %v430 = vmul.f32 %v424, %v414
    %v431 = vmul.f32 %v425, %v415
    %v432 = vsub.f32 %v369, %v430
    %v433 = vsub.f32 %v369, %v431
    %vm434 = vcmp.eq.s32.totalorder %v345, 1
    %v435 = vsel %vm434, 1, 0
    %v436 = vcvt.s32.f32 %v435
    %vm437 = vcmp.eq.s32.totalorder %v347, 1
    %v438 = vsel %vm437, 1, 0
    %v439 = vcvt.s32.f32 %v438
    %v440 = vmul.f32 %v428, %v436
    %v441 = vmul.f32 %v429, %v436
    %v442 = vsel %vm337, %v440, 0.0
    %v443 = vrot.slane %v442, 4
    %v444 = vadd.f32 %v442, %v443
    %v445 = vrot.slane %v444, 2
    %v446 = vadd.f32 %v444, %v445
    %v447 = vrot.slane %v446, 1
    %v448 = vadd.f32 %v446, %v447
    %v449 = vsel %vm337, %v441, 0.0
    %v450 = vrot.slane %v449, 4
    %v451 = vadd.f32 %v449, %v450
    %v452 = vrot.slane %v451, 2
    %v453 = vadd.f32 %v451, %v452
    %v454 = vrot.slane %v453, 1
    %v455 = vadd.f32 %v453, %v454
    %v456 = vmul.f32 %v432, %v436
    %v457 = vmul.f32 %v433, %v436
    %v458 = vsel %vm337, %v456, 0.0
    %v459 = vrot.slane %v458, 4
    %v460 = vadd.f32 %v458, %v459
    %v461 = vrot.slane %v460, 2
    %v462 = vadd.f32 %v460, %v461
    %v463 = vrot.slane %v462, 1
    %v464 = vadd.f32 %v462, %v463
    %v465 = vsel %vm337, %v457, 0.0
    %v466 = vrot.slane %v465, 4
    %v467 = vadd.f32 %v465, %v466
    %v468 = vrot.slane %v467, 2
    %v469 = vadd.f32 %v467, %v468
    %v470 = vrot.slane %v469, 1
    %v471 = vadd.f32 %v469, %v470
    %v472 = vmul.f32 %v448, %v439
    %v473 = vmul.f32 %v455, %v439
    %v474 = vsel %vm337, %v472, 0.0
    %475 = vadd.xlane.f32.xlu0 %v474
    %v476 = vpop.xlane.xlu0 %475
    %v477 = vsel %vm337, %v473, 0.0
    %478 = vadd.xlane.f32.xlu0 %v477
    %v479 = vpop.xlane.xlu0 %478
    %v480 = vrcp.pop %v476
    %v481 = vmul.f32 1.0, %v480
    %v482 = vrcp.pop %v479
    %v483 = vmul.f32 1.0, %v482
    %v484 = vmul.f32 %v448, %v481
    %v485 = vmul.f32 %v455, %v483
    %v486 = vmul.f32 %v464, %v481
    %v487 = vmul.f32 %v471, %v483
    %v488 = vmul.f32 %v428, %v439
    %v489 = vmul.f32 %v429, %v439
    %v490 = vsel %vm337, %v488, 0.0
    %491 = vadd.xlane.f32.xlu0 %v490
    %v492 = vpop.xlane.xlu0 %491
    %v493 = vsel %vm337, %v489, 0.0
    %494 = vadd.xlane.f32.xlu0 %v493
    %v495 = vpop.xlane.xlu0 %494
    %v496 = vsub.f32 %v492, %v436
    %v497 = vsub.f32 %v495, %v436
    %v498 = vmul.f32 %v496, %v484
    %v499 = vmul.f32 %v497, %v485
    %v500 = vsub.f32 %v428, %v498
    %v501 = vsub.f32 %v429, %v499
    %v502 = vmul.f32 %v496, %v486
    %v503 = vmul.f32 %v497, %v487
    %v504 = vsub.f32 %v432, %v502
    %v505 = vsub.f32 %v433, %v503
    %vm506 = vcmp.eq.s32.totalorder %v345, 2
    %v507 = vsel %vm506, 1, 0
    %v508 = vcvt.s32.f32 %v507
    %vm509 = vcmp.eq.s32.totalorder %v347, 2
    %v510 = vsel %vm509, 1, 0
    %v511 = vcvt.s32.f32 %v510
    %v512 = vmul.f32 %v500, %v508
    %v513 = vmul.f32 %v501, %v508
    %v514 = vsel %vm337, %v512, 0.0
    %v515 = vrot.slane %v514, 4
    %v516 = vadd.f32 %v514, %v515
    %v517 = vrot.slane %v516, 2
    %v518 = vadd.f32 %v516, %v517
    %v519 = vrot.slane %v518, 1
    %v520 = vadd.f32 %v518, %v519
    %v521 = vsel %vm337, %v513, 0.0
    %v522 = vrot.slane %v521, 4
    %v523 = vadd.f32 %v521, %v522
    %v524 = vrot.slane %v523, 2
    %v525 = vadd.f32 %v523, %v524
    %v526 = vrot.slane %v525, 1
    %v527 = vadd.f32 %v525, %v526
    %v528 = vmul.f32 %v504, %v508
    %v529 = vmul.f32 %v505, %v508
    %v530 = vsel %vm337, %v528, 0.0
    %v531 = vrot.slane %v530, 4
    %v532 = vadd.f32 %v530, %v531
    %v533 = vrot.slane %v532, 2
    %v534 = vadd.f32 %v532, %v533
    %v535 = vrot.slane %v534, 1
    %v536 = vadd.f32 %v534, %v535
    %v537 = vsel %vm337, %v529, 0.0
    %v538 = vrot.slane %v537, 4
    %v539 = vadd.f32 %v537, %v538
    %v540 = vrot.slane %v539, 2
    %v541 = vadd.f32 %v539, %v540
    %v542 = vrot.slane %v541, 1
    %v543 = vadd.f32 %v541, %v542
    %v544 = vmul.f32 %v520, %v511
    %v545 = vmul.f32 %v527, %v511
    %v546 = vsel %vm337, %v544, 0.0
    %547 = vadd.xlane.f32.xlu0 %v546
    %v548 = vpop.xlane.xlu0 %547
    %v549 = vsel %vm337, %v545, 0.0
    %550 = vadd.xlane.f32.xlu0 %v549
    %v551 = vpop.xlane.xlu0 %550
    %v552 = vrcp.pop %v548
    %v553 = vmul.f32 1.0, %v552
    %v554 = vrcp.pop %v551
    %v555 = vmul.f32 1.0, %v554
    %v556 = vmul.f32 %v520, %v553
    %v557 = vmul.f32 %v527, %v555
    %v558 = vmul.f32 %v536, %v553
    %v559 = vmul.f32 %v543, %v555
    %v560 = vmul.f32 %v500, %v511
    %v561 = vmul.f32 %v501, %v511
    %v562 = vsel %vm337, %v560, 0.0
    %563 = vadd.xlane.f32.xlu0 %v562
    %v564 = vpop.xlane.xlu0 %563
    %v565 = vsel %vm337, %v561, 0.0
    %566 = vadd.xlane.f32.xlu0 %v565
    %v567 = vpop.xlane.xlu0 %566
    %v568 = vsub.f32 %v564, %v508
    %v569 = vsub.f32 %v567, %v508
    %v570 = vmul.f32 %v568, %v556
    %v571 = vmul.f32 %v569, %v557
    %v572 = vsub.f32 %v500, %v570
    %v573 = vsub.f32 %v501, %v571
    %v574 = vmul.f32 %v568, %v558
    %v575 = vmul.f32 %v569, %v559
    %v576 = vsub.f32 %v504, %v574
    %v577 = vsub.f32 %v505, %v575
    %vm578 = vcmp.eq.s32.totalorder %v345, 3
    %v579 = vsel %vm578, 1, 0
    %v580 = vcvt.s32.f32 %v579
    %vm581 = vcmp.eq.s32.totalorder %v347, 3
    %v582 = vsel %vm581, 1, 0
    %v583 = vcvt.s32.f32 %v582
    %v584 = vmul.f32 %v572, %v580
    %v585 = vmul.f32 %v573, %v580
    %v586 = vsel %vm337, %v584, 0.0
    %v587 = vrot.slane %v586, 4
    %v588 = vadd.f32 %v586, %v587
    %v589 = vrot.slane %v588, 2
    %v590 = vadd.f32 %v588, %v589
    %v591 = vrot.slane %v590, 1
    %v592 = vadd.f32 %v590, %v591
    %v593 = vsel %vm337, %v585, 0.0
    %v594 = vrot.slane %v593, 4
    %v595 = vadd.f32 %v593, %v594
    %v596 = vrot.slane %v595, 2
    %v597 = vadd.f32 %v595, %v596
    %v598 = vrot.slane %v597, 1
    %v599 = vadd.f32 %v597, %v598
    %v600 = vmul.f32 %v576, %v580
    %v601 = vmul.f32 %v577, %v580
    %v602 = vsel %vm337, %v600, 0.0
    %v603 = vrot.slane %v602, 4
    %v604 = vadd.f32 %v602, %v603
    %v605 = vrot.slane %v604, 2
    %v606 = vadd.f32 %v604, %v605
    %v607 = vrot.slane %v606, 1
    %v608 = vadd.f32 %v606, %v607
    %v609 = vsel %vm337, %v601, 0.0
    %v610 = vrot.slane %v609, 4
    %v611 = vadd.f32 %v609, %v610
    %v612 = vrot.slane %v611, 2
    %v613 = vadd.f32 %v611, %v612
    %v614 = vrot.slane %v613, 1
    %v615 = vadd.f32 %v613, %v614
    %v616 = vmul.f32 %v592, %v583
    %v617 = vmul.f32 %v599, %v583
    %v618 = vsel %vm337, %v616, 0.0
    %619 = vadd.xlane.f32.xlu0 %v618
    %v620 = vpop.xlane.xlu0 %619
    %v621 = vsel %vm337, %v617, 0.0
    %622 = vadd.xlane.f32.xlu0 %v621
    %v623 = vpop.xlane.xlu0 %622
    %v624 = vrcp.pop %v620
    %v625 = vmul.f32 1.0, %v624
    %v626 = vrcp.pop %v623
    %v627 = vmul.f32 1.0, %v626
    %v628 = vmul.f32 %v592, %v625
    %v629 = vmul.f32 %v599, %v627
    %v630 = vmul.f32 %v608, %v625
    %v631 = vmul.f32 %v615, %v627
    %v632 = vmul.f32 %v572, %v583
    %v633 = vmul.f32 %v573, %v583
    %v634 = vsel %vm337, %v632, 0.0
    %635 = vadd.xlane.f32.xlu0 %v634
    %v636 = vpop.xlane.xlu0 %635
    %v637 = vsel %vm337, %v633, 0.0
    %638 = vadd.xlane.f32.xlu0 %v637
    %v639 = vpop.xlane.xlu0 %638
    %v640 = vsub.f32 %v636, %v580
    %v641 = vsub.f32 %v639, %v580
    %v642 = vmul.f32 %v640, %v628
    %v643 = vmul.f32 %v641, %v629
    %v644 = vsub.f32 %v572, %v642
    %v645 = vsub.f32 %v573, %v643
    %v646 = vmul.f32 %v640, %v630
    %v647 = vmul.f32 %v641, %v631
    %v648 = vsub.f32 %v576, %v646
    %v649 = vsub.f32 %v577, %v647
    %vm650 = vcmp.eq.s32.totalorder %v345, 4
    %v651 = vsel %vm650, 1, 0
    %v652 = vcvt.s32.f32 %v651
    %vm653 = vcmp.eq.s32.totalorder %v347, 4
    %v654 = vsel %vm653, 1, 0
    %v655 = vcvt.s32.f32 %v654
    %v656 = vmul.f32 %v644, %v652
    %v657 = vmul.f32 %v645, %v652
    %v658 = vsel %vm337, %v656, 0.0
    %v659 = vrot.slane %v658, 4
    %v660 = vadd.f32 %v658, %v659
    %v661 = vrot.slane %v660, 2
    %v662 = vadd.f32 %v660, %v661
    %v663 = vrot.slane %v662, 1
    %v664 = vadd.f32 %v662, %v663
    %v665 = vsel %vm337, %v657, 0.0
    %v666 = vrot.slane %v665, 4
    %v667 = vadd.f32 %v665, %v666
    %v668 = vrot.slane %v667, 2
    %v669 = vadd.f32 %v667, %v668
    %v670 = vrot.slane %v669, 1
    %v671 = vadd.f32 %v669, %v670
    %v672 = vmul.f32 %v648, %v652
    %v673 = vmul.f32 %v649, %v652
    %v674 = vsel %vm337, %v672, 0.0
    %v675 = vrot.slane %v674, 4
    %v676 = vadd.f32 %v674, %v675
    %v677 = vrot.slane %v676, 2
    %v678 = vadd.f32 %v676, %v677
    %v679 = vrot.slane %v678, 1
    %v680 = vadd.f32 %v678, %v679
    %v681 = vsel %vm337, %v673, 0.0
    %v682 = vrot.slane %v681, 4
    %v683 = vadd.f32 %v681, %v682
    %v684 = vrot.slane %v683, 2
    %v685 = vadd.f32 %v683, %v684
    %v686 = vrot.slane %v685, 1
    %v687 = vadd.f32 %v685, %v686
    %v688 = vmul.f32 %v664, %v655
    %v689 = vmul.f32 %v671, %v655
    %v690 = vsel %vm337, %v688, 0.0
    %691 = vadd.xlane.f32.xlu0 %v690
    %v692 = vpop.xlane.xlu0 %691
    %v693 = vsel %vm337, %v689, 0.0
    %694 = vadd.xlane.f32.xlu0 %v693
    %v695 = vpop.xlane.xlu0 %694
    %v696 = vrcp.pop %v692
    %v697 = vmul.f32 1.0, %v696
    %v698 = vrcp.pop %v695
    %v699 = vmul.f32 1.0, %v698
    %v700 = vmul.f32 %v664, %v697
    %v701 = vmul.f32 %v671, %v699
    %v702 = vmul.f32 %v680, %v697
    %v703 = vmul.f32 %v687, %v699
    %v704 = vmul.f32 %v644, %v655
    %v705 = vmul.f32 %v645, %v655
    %v706 = vsel %vm337, %v704, 0.0
    %707 = vadd.xlane.f32.xlu0 %v706
    %v708 = vpop.xlane.xlu0 %707
    %v709 = vsel %vm337, %v705, 0.0
    %710 = vadd.xlane.f32.xlu0 %v709
    %v711 = vpop.xlane.xlu0 %710
    %v712 = vsub.f32 %v708, %v652
    %v713 = vsub.f32 %v711, %v652
    %v714 = vmul.f32 %v712, %v700
    %v715 = vmul.f32 %v713, %v701
    %v716 = vsub.f32 %v644, %v714
    %v717 = vsub.f32 %v645, %v715
    %v718 = vmul.f32 %v712, %v702
    %v719 = vmul.f32 %v713, %v703
    %v720 = vsub.f32 %v648, %v718
    %v721 = vsub.f32 %v649, %v719
    %vm722 = vcmp.eq.s32.totalorder %v345, 5
    %v723 = vsel %vm722, 1, 0
    %v724 = vcvt.s32.f32 %v723
    %vm725 = vcmp.eq.s32.totalorder %v347, 5
    %v726 = vsel %vm725, 1, 0
    %v727 = vcvt.s32.f32 %v726
    %v728 = vmul.f32 %v716, %v724
    %v729 = vmul.f32 %v717, %v724
    %v730 = vsel %vm337, %v728, 0.0
    %v731 = vrot.slane %v730, 4
    %v732 = vadd.f32 %v730, %v731
    %v733 = vrot.slane %v732, 2
    %v734 = vadd.f32 %v732, %v733
    %v735 = vrot.slane %v734, 1
    %v736 = vadd.f32 %v734, %v735
    %v737 = vsel %vm337, %v729, 0.0
    %v738 = vrot.slane %v737, 4
    %v739 = vadd.f32 %v737, %v738
    %v740 = vrot.slane %v739, 2
    %v741 = vadd.f32 %v739, %v740
    %v742 = vrot.slane %v741, 1
    %v743 = vadd.f32 %v741, %v742
    %v744 = vmul.f32 %v720, %v724
    %v745 = vmul.f32 %v721, %v724
    %v746 = vsel %vm337, %v744, 0.0
    %v747 = vrot.slane %v746, 4
    %v748 = vadd.f32 %v746, %v747
    %v749 = vrot.slane %v748, 2
    %v750 = vadd.f32 %v748, %v749
    %v751 = vrot.slane %v750, 1
    %v752 = vadd.f32 %v750, %v751
    %v753 = vsel %vm337, %v745, 0.0
    %v754 = vrot.slane %v753, 4
    %v755 = vadd.f32 %v753, %v754
    %v756 = vrot.slane %v755, 2
    %v757 = vadd.f32 %v755, %v756
    %v758 = vrot.slane %v757, 1
    %v759 = vadd.f32 %v757, %v758
    %v760 = vmul.f32 %v736, %v727
    %v761 = vmul.f32 %v743, %v727
    %v762 = vsel %vm337, %v760, 0.0
    %763 = vadd.xlane.f32.xlu0 %v762
    %v764 = vpop.xlane.xlu0 %763
    %v765 = vsel %vm337, %v761, 0.0
    %766 = vadd.xlane.f32.xlu0 %v765
    %v767 = vpop.xlane.xlu0 %766
    %v768 = vrcp.pop %v764
    %v769 = vmul.f32 1.0, %v768
    %v770 = vrcp.pop %v767
    %v771 = vmul.f32 1.0, %v770
    %v772 = vmul.f32 %v736, %v769
    %v773 = vmul.f32 %v743, %v771
    %v774 = vmul.f32 %v752, %v769
    %v775 = vmul.f32 %v759, %v771
    %v776 = vmul.f32 %v716, %v727
    %v777 = vmul.f32 %v717, %v727
    %v778 = vsel %vm337, %v776, 0.0
    %779 = vadd.xlane.f32.xlu0 %v778
    %v780 = vpop.xlane.xlu0 %779
    %v781 = vsel %vm337, %v777, 0.0
    %782 = vadd.xlane.f32.xlu0 %v781
    %v783 = vpop.xlane.xlu0 %782
    %v784 = vsub.f32 %v780, %v724
    %v785 = vsub.f32 %v783, %v724
    %v786 = vmul.f32 %v784, %v772
    %v787 = vmul.f32 %v785, %v773
    %v788 = vsub.f32 %v716, %v786
    %v789 = vsub.f32 %v717, %v787
    %v790 = vmul.f32 %v784, %v774
    %v791 = vmul.f32 %v785, %v775
    %v792 = vsub.f32 %v720, %v790
    %v793 = vsub.f32 %v721, %v791
    %vm794 = vcmp.eq.s32.totalorder %v345, 6
    %v795 = vsel %vm794, 1, 0
    %v796 = vcvt.s32.f32 %v795
    %vm797 = vcmp.eq.s32.totalorder %v347, 6
    %v798 = vsel %vm797, 1, 0
    %v799 = vcvt.s32.f32 %v798
    %v800 = vmul.f32 %v788, %v796
    %v801 = vmul.f32 %v789, %v796
    %v802 = vsel %vm337, %v800, 0.0
    %v803 = vrot.slane %v802, 4
    %v804 = vadd.f32 %v802, %v803
    %v805 = vrot.slane %v804, 2
    %v806 = vadd.f32 %v804, %v805
    %v807 = vrot.slane %v806, 1
    %v808 = vadd.f32 %v806, %v807
    %v809 = vsel %vm337, %v801, 0.0
    %v810 = vrot.slane %v809, 4
    %v811 = vadd.f32 %v809, %v810
    %v812 = vrot.slane %v811, 2
    %v813 = vadd.f32 %v811, %v812
    %v814 = vrot.slane %v813, 1
    %v815 = vadd.f32 %v813, %v814
    %v816 = vmul.f32 %v792, %v796
    %v817 = vmul.f32 %v793, %v796
    %v818 = vsel %vm337, %v816, 0.0
    %v819 = vrot.slane %v818, 4
    %v820 = vadd.f32 %v818, %v819
    %v821 = vrot.slane %v820, 2
    %v822 = vadd.f32 %v820, %v821
    %v823 = vrot.slane %v822, 1
    %v824 = vadd.f32 %v822, %v823
    %v825 = vsel %vm337, %v817, 0.0
    %v826 = vrot.slane %v825, 4
    %v827 = vadd.f32 %v825, %v826
    %v828 = vrot.slane %v827, 2
    %v829 = vadd.f32 %v827, %v828
    %v830 = vrot.slane %v829, 1
    %v831 = vadd.f32 %v829, %v830
    %v832 = vmul.f32 %v808, %v799
    %v833 = vmul.f32 %v815, %v799
    %v834 = vsel %vm337, %v832, 0.0
    %835 = vadd.xlane.f32.xlu0 %v834
    %v836 = vpop.xlane.xlu0 %835
    %v837 = vsel %vm337, %v833, 0.0
    %838 = vadd.xlane.f32.xlu0 %v837
    %v839 = vpop.xlane.xlu0 %838
    %v840 = vrcp.pop %v836
    %v841 = vmul.f32 1.0, %v840
    %v842 = vrcp.pop %v839
    %v843 = vmul.f32 1.0, %v842
    %v844 = vmul.f32 %v808, %v841
    %v845 = vmul.f32 %v815, %v843
    %v846 = vmul.f32 %v824, %v841
    %v847 = vmul.f32 %v831, %v843
    %v848 = vmul.f32 %v788, %v799
    %v849 = vmul.f32 %v789, %v799
    %v850 = vsel %vm337, %v848, 0.0
    %851 = vadd.xlane.f32.xlu0 %v850
    %v852 = vpop.xlane.xlu0 %851
    %v853 = vsel %vm337, %v849, 0.0
    %854 = vadd.xlane.f32.xlu0 %v853
    %v855 = vpop.xlane.xlu0 %854
    %v856 = vsub.f32 %v852, %v796
    %v857 = vsub.f32 %v855, %v796
    %v858 = vmul.f32 %v856, %v844
    %v859 = vmul.f32 %v857, %v845
    %v860 = vsub.f32 %v788, %v858
    %v861 = vsub.f32 %v789, %v859
    %v862 = vmul.f32 %v856, %v846
    %v863 = vmul.f32 %v857, %v847
    %v864 = vsub.f32 %v792, %v862
    %v865 = vsub.f32 %v793, %v863
    %vm866 = vcmp.eq.s32.totalorder %v345, 7
    %v867 = vsel %vm866, 1, 0
    %v868 = vcvt.s32.f32 %v867
    %vm869 = vcmp.eq.s32.totalorder %v347, 7
    %v870 = vsel %vm869, 1, 0
    %v871 = vcvt.s32.f32 %v870
    %v872 = vmul.f32 %v860, %v868
    %v873 = vmul.f32 %v861, %v868
    %v874 = vsel %vm337, %v872, 0.0
    %v875 = vrot.slane %v874, 4
    %v876 = vadd.f32 %v874, %v875
    %v877 = vrot.slane %v876, 2
    %v878 = vadd.f32 %v876, %v877
    %v879 = vrot.slane %v878, 1
    %v880 = vadd.f32 %v878, %v879
    %v881 = vsel %vm337, %v873, 0.0
    %v882 = vrot.slane %v881, 4
    %v883 = vadd.f32 %v881, %v882
    %v884 = vrot.slane %v883, 2
    %v885 = vadd.f32 %v883, %v884
    %v886 = vrot.slane %v885, 1
    %v887 = vadd.f32 %v885, %v886
    %v888 = vmul.f32 %v864, %v868
    %v889 = vmul.f32 %v865, %v868
    %v890 = vsel %vm337, %v888, 0.0
    %v891 = vrot.slane %v890, 4
    %v892 = vadd.f32 %v890, %v891
    %v893 = vrot.slane %v892, 2
    %v894 = vadd.f32 %v892, %v893
    %v895 = vrot.slane %v894, 1
    %v896 = vadd.f32 %v894, %v895
    %v897 = vsel %vm337, %v889, 0.0
    %v898 = vrot.slane %v897, 4
    %v899 = vadd.f32 %v897, %v898
    %v900 = vrot.slane %v899, 2
    %v901 = vadd.f32 %v899, %v900
    %v902 = vrot.slane %v901, 1
    %v903 = vadd.f32 %v901, %v902
    %v904 = vmul.f32 %v880, %v871
    %v905 = vmul.f32 %v887, %v871
    %v906 = vsel %vm337, %v904, 0.0
    %907 = vadd.xlane.f32.xlu0 %v906
    %v908 = vpop.xlane.xlu0 %907
    %v909 = vsel %vm337, %v905, 0.0
    %910 = vadd.xlane.f32.xlu0 %v909
    %v911 = vpop.xlane.xlu0 %910
    %v912 = vrcp.pop %v908
    %v913 = vmul.f32 1.0, %v912
    %v914 = vrcp.pop %v911
    %v915 = vmul.f32 1.0, %v914
    %v916 = vmul.f32 %v896, %v913
    %v917 = vmul.f32 %v903, %v915
    %v918 = vmul.f32 %v860, %v871
    %v919 = vmul.f32 %v861, %v871
    %v920 = vsel %vm337, %v918, 0.0
    %921 = vadd.xlane.f32.xlu0 %v920
    %v922 = vpop.xlane.xlu0 %921
    %v923 = vsel %vm337, %v919, 0.0
    %924 = vadd.xlane.f32.xlu0 %v923
    %v925 = vpop.xlane.xlu0 %924
    %v926 = vsub.f32 %v922, %v868
    %v927 = vsub.f32 %v925, %v868
    %v928 = vmul.f32 %v926, %v916
    %v929 = vmul.f32 %v927, %v917
    %v930 = vsub.f32 %v864, %v928
    %v931 = vsub.f32 %v865, %v929
    %932 = vxpose.xlu0.b32.start [1/16] %v930, 128
    %933 = vxpose.xlu0.b32.cont [2/16] 0.0, 128
    %934 = vxpose.xlu0.b32.cont [3/16] 0.0, 128
    %935 = vxpose.xlu0.b32.cont [4/16] 0.0, 128
    %936 = vxpose.xlu0.b32.cont [5/16] 0.0, 128
    %937 = vxpose.xlu0.b32.cont [6/16] 0.0, 128
    %938 = vxpose.xlu0.b32.cont [7/16] 0.0, 128
    %939 = vxpose.xlu0.b32.cont [8/16] 0.0, 128
    %940 = vxpose.xlu0.b32.cont [9/16] 0.0, 128
    %941 = vxpose.xlu0.b32.cont [10/16] 0.0, 128
    %942 = vxpose.xlu0.b32.cont [11/16] 0.0, 128
    %943 = vxpose.xlu0.b32.cont [12/16] 0.0, 128
    %944 = vxpose.xlu0.b32.cont [13/16] 0.0, 128
    %945 = vxpose.xlu0.b32.cont [14/16] 0.0, 128
    %946 = vxpose.xlu0.b32.cont [15/16] 0.0, 128
    %947 = vxpose.xlu0.b32.end [16/16] 0.0, 128
    %v948 = vpop.trf.xlu0
    %v949 = vpop.trf.xlu0
    %v950 = vpop.trf.xlu0
    %v951 = vpop.trf.xlu0
    %v952 = vpop.trf.xlu0
    %v953 = vpop.trf.xlu0
    %v954 = vpop.trf.xlu0
    %v955 = vpop.trf.xlu0
    %v956 = vpop.trf.xlu0
    %v957 = vpop.trf.xlu0
    %v958 = vpop.trf.xlu0
    %v959 = vpop.trf.xlu0
    %v960 = vpop.trf.xlu0
    %v961 = vpop.trf.xlu0
    %v962 = vpop.trf.xlu0
    %v963 = vpop.trf.xlu0
    %964 = vxpose.xlu0.b32.start [1/16] %v931, 128
    %965 = vxpose.xlu0.b32.cont [2/16] 0.0, 128
    %966 = vxpose.xlu0.b32.cont [3/16] 0.0, 128
    %967 = vxpose.xlu0.b32.cont [4/16] 0.0, 128
    %968 = vxpose.xlu0.b32.cont [5/16] 0.0, 128
    %969 = vxpose.xlu0.b32.cont [6/16] 0.0, 128
    %970 = vxpose.xlu0.b32.cont [7/16] 0.0, 128
    %971 = vxpose.xlu0.b32.cont [8/16] 0.0, 128
    %972 = vxpose.xlu0.b32.cont [9/16] 0.0, 128
    %973 = vxpose.xlu0.b32.cont [10/16] 0.0, 128
    %974 = vxpose.xlu0.b32.cont [11/16] 0.0, 128
    %975 = vxpose.xlu0.b32.cont [12/16] 0.0, 128
    %976 = vxpose.xlu0.b32.cont [13/16] 0.0, 128
    %977 = vxpose.xlu0.b32.cont [14/16] 0.0, 128
    %978 = vxpose.xlu0.b32.cont [15/16] 0.0, 128
    %979 = vxpose.xlu0.b32.end [16/16] 0.0, 128
    %v980 = vpop.trf.xlu0
    %v981 = vpop.trf.xlu0
    %v982 = vpop.trf.xlu0
    %v983 = vpop.trf.xlu0
    %v984 = vpop.trf.xlu0
    %v985 = vpop.trf.xlu0
    %v986 = vpop.trf.xlu0
    %v987 = vpop.trf.xlu0
    %v988 = vpop.trf.xlu0
    %v989 = vpop.trf.xlu0
    %v990 = vpop.trf.xlu0
    %v991 = vpop.trf.xlu0
    %v992 = vpop.trf.xlu0
    %v993 = vpop.trf.xlu0
    %v994 = vpop.trf.xlu0
    %v995 = vpop.trf.xlu0
    %v996 = vsel %vm366, %v930, 0.0
    %v997 = vsel %vm366, %v931, 0.0
    %v998 = vsel %vm337, %v996, 0.0
    %999 = vadd.xlane.f32.xlu0 %v998
    %v1000 = vpop.xlane.xlu0 %999
    %v1001 = vsel %vm337, %v997, 0.0
    %1002 = vadd.xlane.f32.xlu0 %v1001
    %v1003 = vpop.xlane.xlu0 %1002
    %v1004 = vmul.f32 %v334, %v1000
    %v1005 = vmul.f32 %v336, %v1003
    %1008 = vrot.lane.b32.xlu0 %v1004, 64
    %v1009 = vpop.permute.xlu0 %1008
    %1010 = vrot.lane.b32.xlu0 %v1005, 64
    %v1011 = vpop.permute.xlu0 %1010
    %1014 = vxpose.xlu0.b32.start [1/16] %v1009, 128
    %1015 = vxpose.xlu0.b32.cont [2/16] 0.0, 128
    %1016 = vxpose.xlu0.b32.cont [3/16] 0.0, 128
    %1017 = vxpose.xlu0.b32.cont [4/16] 0.0, 128
    %1018 = vxpose.xlu0.b32.cont [5/16] 0.0, 128
    %1019 = vxpose.xlu0.b32.cont [6/16] 0.0, 128
    %1020 = vxpose.xlu0.b32.cont [7/16] 0.0, 128
    %1021 = vxpose.xlu0.b32.cont [8/16] 0.0, 128
    %1022 = vxpose.xlu0.b32.cont [9/16] 0.0, 128
    %1023 = vxpose.xlu0.b32.cont [10/16] 0.0, 128
    %1024 = vxpose.xlu0.b32.cont [11/16] 0.0, 128
    %1025 = vxpose.xlu0.b32.cont [12/16] 0.0, 128
    %1026 = vxpose.xlu0.b32.cont [13/16] 0.0, 128
    %1027 = vxpose.xlu0.b32.cont [14/16] 0.0, 128
    %1028 = vxpose.xlu0.b32.cont [15/16] 0.0, 128
    %1029 = vxpose.xlu0.b32.end [16/16] 0.0, 128
    %v1030 = vpop.trf.xlu0
    %v1031 = vpop.trf.xlu0
    %v1032 = vpop.trf.xlu0
    %v1033 = vpop.trf.xlu0
    %v1034 = vpop.trf.xlu0
    %v1035 = vpop.trf.xlu0
    %v1036 = vpop.trf.xlu0
    %v1037 = vpop.trf.xlu0
    %v1038 = vpop.trf.xlu0
    %v1039 = vpop.trf.xlu0
    %v1040 = vpop.trf.xlu0
    %v1041 = vpop.trf.xlu0
    %v1042 = vpop.trf.xlu0
    %v1043 = vpop.trf.xlu0
    %v1044 = vpop.trf.xlu0
    %v1045 = vpop.trf.xlu0
    %1046 = vxpose.xlu0.b32.start [1/16] %v1011, 128
    %1047 = vxpose.xlu0.b32.cont [2/16] 0.0, 128
    %1048 = vxpose.xlu0.b32.cont [3/16] 0.0, 128
    %1049 = vxpose.xlu0.b32.cont [4/16] 0.0, 128
    %1050 = vxpose.xlu0.b32.cont [5/16] 0.0, 128
    %1051 = vxpose.xlu0.b32.cont [6/16] 0.0, 128
    %1052 = vxpose.xlu0.b32.cont [7/16] 0.0, 128
    %1053 = vxpose.xlu0.b32.cont [8/16] 0.0, 128
    %1054 = vxpose.xlu0.b32.cont [9/16] 0.0, 128
    %1055 = vxpose.xlu0.b32.cont [10/16] 0.0, 128
    %1056 = vxpose.xlu0.b32.cont [11/16] 0.0, 128
    %1057 = vxpose.xlu0.b32.cont [12/16] 0.0, 128
    %1058 = vxpose.xlu0.b32.cont [13/16] 0.0, 128
    %1059 = vxpose.xlu0.b32.cont [14/16] 0.0, 128
    %1060 = vxpose.xlu0.b32.cont [15/16] 0.0, 128
    %1061 = vxpose.xlu0.b32.end [16/16] 0.0, 128
    %v1062 = vpop.trf.xlu0
    %v1063 = vpop.trf.xlu0
    %v1064 = vpop.trf.xlu0
    %v1065 = vpop.trf.xlu0
    %v1066 = vpop.trf.xlu0
    %v1067 = vpop.trf.xlu0
    %v1068 = vpop.trf.xlu0
    %v1069 = vpop.trf.xlu0
    %v1070 = vpop.trf.xlu0
    %v1071 = vpop.trf.xlu0
    %v1072 = vpop.trf.xlu0
    %v1073 = vpop.trf.xlu0
    %v1074 = vpop.trf.xlu0
    %v1075 = vpop.trf.xlu0
    %v1076 = vpop.trf.xlu0
    %v1077 = vpop.trf.xlu0
    %vm1078 = vcmask 57344
    %1079 = vst.msk [vmem:[#allocation8] sm:$0x1] %vm1078, %v1030
    %1080 = vst.msk [vmem:[#allocation8 + $0x1] sm:$0x1] %vm1078, %v1062
    %v1081 = vsub.f32 %v1000, %v948
    %v1082 = vsub.f32 %v1003, %v980
    %v1083 = vmul.f32 %v330, %v1081
    %v1084 = vmul.f32 %v332, %v1082
    %vm1085 = vcmp.ne.f32.partialorder %v221, 0.0
    %vm1086 = vcmp.ne.f32.partialorder %v222, 0.0
    %v1087 = vsel %vm1085, 1, 0
    %v1088 = vsel %vm1086, 1, 0
    %v1089 = vlaneseq
    %v1090 = vshrl.u32 %v1089, 7
    %v1091 = vsub.s32 0, %v1090
    %v1092 = vrot.slane %v1087, %v1091
    %v1093 = vlaneseq
    %v1094 = vshrl.u32 %v1093, 7
    %v1095 = vsub.s32 0, %v1094
    %v1096 = vrot.slane %v1088, %v1095
    %vm1097 = vcmp.eq.s32.totalorder %v1092, 1
    %vm1098 = vcmp.eq.s32.totalorder %v1096, 1
    %v1099 = vsel %vm1097, 0.0, %v1083
    %v1100 = vsel %vm1098, 0.0, %v1084
    %v1101 = vpack.c.bf16 %v1099, %v1099
    %v1102 = vpack.c.bf16 %v1100, %v1100
    %v1103 = vpack.c.bf16 %v50, %v50
    %v1104 = vpack.c.bf16 %v51, %v51
    %v1106 = vsel %vm337, %v1101, 0
    %vm1108 = vcmask 1043456
    %v1110 = vsel %vm1108, %v1103, 0
    %1112 = vmatprep.subr.bf16.mxu0 0
    %1113 = vmatpush1.bf16.msra.mxu0 0
    %1114 = vmatprep.subr.bf16.mxu0 0
    %1115 = vmatpush1.bf16.msra.mxu0 0
    %1116 = vmatprep.subr.bf16.mxu0 0
    %1117 = vmatpush1.bf16.msra.mxu0 0
    %1118 = vmatprep.subr.bf16.mxu0 0
    %1119 = vmatpush1.bf16.msra.mxu0 0
    %1120 = vmatprep.subr.bf16.mxu0 0
    %1121 = vmatpush1.bf16.msra.mxu0 0
    %1122 = vmatprep.subr.bf16.mxu0 0
    %1123 = vmatpush1.bf16.msra.mxu0 0
    %1124 = vmatprep.subr.bf16.mxu0 0
    %1125 = vmatpush1.bf16.msra.mxu0 0
    %1126 = vmatprep.subr.bf16.mxu0 0
    %1127 = vmatpush1.bf16.msra.mxu0 %v1110
    %1128 = vmatprep.subr.bf16.mxu0 0
    %1129 = vmatpush2.bf16.msra.mxu0 0
    %1130 = vmatprep.subr.bf16.mxu0 0
    %1131 = vmatpush2.bf16.msra.mxu0 0
    %1132 = vmatprep.subr.bf16.mxu0 0
    %1133 = vmatpush2.bf16.msra.mxu0 0
    %1134 = vmatprep.subr.bf16.mxu0 0
    %1135 = vmatpush2.bf16.msra.mxu0 0
    %1136 = vmatprep.subr.bf16.mxu0 0
    %1137 = vmatpush2.bf16.msra.mxu0 0
    %1138 = vmatprep.subr.bf16.mxu0 0
    %1139 = vmatpush2.bf16.msra.mxu0 0
    %1140 = vmatprep.subr.bf16.mxu0 0
    %1141 = vmatpush2.bf16.msra.mxu0 0
    %1142 = vmatprep.subr.bf16.mxu0 0
    %1143 = vmatpush2.bf16.msra.mxu0 0
    %1144 = vmatprep.mubr.bf16.mxu0 0
    %1145 = vmatmul.mubr.bf16.gmra.mxu0 %v1106
    %v1146 = vpop.f32.mrf.mxu0
    %v1147 = vadd.f32 0.0, %v1146
    %v1148 = vpop.f32.mrf.mxu0
    %v1149 = vpop.f32.mrf.mxu0
    %v1150 = vpop.f32.mrf.mxu0
    %1151 = vdwg.mxu0
    %v1153 = vsel %vm337, %v1102, 0
    %v1156 = vsel %vm1108, %v1104, 0
    %1158 = vmatprep.subr.bf16.mxu0 0
    %1159 = vmatpush1.bf16.msra.mxu0 0
    %1160 = vmatprep.subr.bf16.mxu0 0
    %1161 = vmatpush1.bf16.msra.mxu0 0
    %1162 = vmatprep.subr.bf16.mxu0 0
    %1163 = vmatpush1.bf16.msra.mxu0 0
    %1164 = vmatprep.subr.bf16.mxu0 0
    %1165 = vmatpush1.bf16.msra.mxu0 0
    %1166 = vmatprep.subr.bf16.mxu0 0
    %1167 = vmatpush1.bf16.msra.mxu0 0
    %1168 = vmatprep.subr.bf16.mxu0 0
    %1169 = vmatpush1.bf16.msra.mxu0 0
    %1170 = vmatprep.subr.bf16.mxu0 0
    %1171 = vmatpush1.bf16.msra.mxu0 0
    %1172 = vmatprep.subr.bf16.mxu0 0
    %1173 = vmatpush1.bf16.msra.mxu0 %v1156
    %1174 = vmatprep.subr.bf16.mxu0 0
    %1175 = vmatpush2.bf16.msra.mxu0 0
    %1176 = vmatprep.subr.bf16.mxu0 0
    %1177 = vmatpush2.bf16.msra.mxu0 0
    %1178 = vmatprep.subr.bf16.mxu0 0
    %1179 = vmatpush2.bf16.msra.mxu0 0
    %1180 = vmatprep.subr.bf16.mxu0 0
    %1181 = vmatpush2.bf16.msra.mxu0 0
    %1182 = vmatprep.subr.bf16.mxu0 0
    %1183 = vmatpush2.bf16.msra.mxu0 0
    %1184 = vmatprep.subr.bf16.mxu0 0
    %1185 = vmatpush2.bf16.msra.mxu0 0
    %1186 = vmatprep.subr.bf16.mxu0 0
    %1187 = vmatpush2.bf16.msra.mxu0 0
    %1188 = vmatprep.subr.bf16.mxu0 0
    %1189 = vmatpush2.bf16.msra.mxu0 0
    %1190 = vmatprep.mubr.bf16.mxu0 0
    %1191 = vmatmul.mubr.bf16.gmra.mxu0 %v1153
    %v1192 = vpop.f32.mrf.mxu0
    %v1193 = vadd.f32 0.0, %v1192
    %v1194 = vpop.f32.mrf.mxu0
    %v1195 = vpop.f32.mrf.mxu0
    %v1196 = vpop.f32.mrf.mxu0
    %1197 = vdwg.mxu0
    %1198 = vst.msk [vmem:[#allocation7] sm:$0xff] %vm76, %v1147
    %1199 = vst.msk [vmem:[#allocation7 + $0x8] sm:$0xff] %vm76, %v1193
    // Predicated region
    $region26: #{tpu_custom_call.1} parent=1 // pred_check
      _
    $region27: #{tpu_custom_call.1} parent=1 // pred_check_branch
      %1201 = sbr.rel (0) target = $region29
    $region28: #{tpu_custom_call.1} parent=1 // pred_region
      %s1203 = ssub.s32 256, 256
      %1204 = vsyncadd [#allocation4], %s1203
      %s1205 = sshll.u32 [#allocation7], 4
      %s1206 = int_to_ptr.vmem [resolvable:$true] %s1205
      %1211 = dma.vmem_to_hbm [thread:$0]  %s1206, 256, %s4, [#allocation4], 128, 128, 8
    $region29: #{tpu_custom_call.1} parent=1 // pred_fallthru
      _
    // Predicated region
    $region30: #{tpu_custom_call.1} parent=1 // pred_check
      _
    $region31: #{tpu_custom_call.1} parent=1 // pred_check_branch
      %1213 = sbr.rel (0) target = $region33
    $region32: #{tpu_custom_call.1} parent=1 // pred_region
      %s1215 = ssub.s32 32, 32
      %1216 = vsyncadd [#allocation9], %s1215
      %s1217 = sshll.u32 [#allocation8], 4
      %s1218 = int_to_ptr.vmem [resolvable:$true] %s1217
      %1223 = dma.vmem_to_hbm [thread:$0]  %s1218, 32, %s5, [#allocation9], 16, 16, 1
    $region33: #{tpu_custom_call.1} parent=1 // pred_fallthru
      _
    // Predicated region
    $region34: #{tpu_custom_call.1} parent=1 // pred_check
      _
    $region35: #{tpu_custom_call.1} parent=1 // pred_check_branch
      %1225 = sbr.rel (0) target = $region37
    $region36: #{tpu_custom_call.1} parent=1 // pred_region
      %1226 = dma.done [#allocation4], 256
    $region37: #{tpu_custom_call.1} parent=1 // pred_fallthru
      _
    // Predicated region
    $region38: #{tpu_custom_call.1} parent=1 // pred_check
      _
    $region39: #{tpu_custom_call.1} parent=1 // pred_check_branch
      %1228 = sbr.rel (0) target = $region41
    $region40: #{tpu_custom_call.1} parent=1 // pred_region
      %1229 = dma.done [#allocation9], 32
    $region41: #{tpu_custom_call.1} parent=1 // pred_fallthru
      _
    %1230 = vsyncpa [#allocation3], 1
    %1231 = vsyncpa [#allocation6], 1
    %1232 = vsyncpa [#allocation4], 1
    %1233 = vsyncpa [#allocation9], 1

</llo_original>
